<compile_context>
chip_gen: v6e
topology: v6e:2x2x1
jax: 0.10.0
libtpu: 0.0.40
codegen_flags: <defaults>
</compile_context>

<pallas_src>
import jax
import jax.numpy as jnp
from jax import lax
from jax.experimental import pallas as pl
from jax.experimental.pallas import tpu as pltpu


def _dot_nt(a, b):
    """a @ b.T on the MXU via dot_general (no materialized transpose)."""
    return lax.dot_general(a, b, (((1,), (1,)), ((), ())),
                           preferred_element_type=jnp.float32)


def etm_kernel(x_ref, eps_ref, w1_ref, b1_ref, gamma_ref, betabn_ref,
               wmuls_ref, bmuls_ref, temb_ref, wemb_ref,
               recon_ref, stats_ref,
               h_acc, m_sc, l_sc, theta_sc, logit_sc):
    p = pl.program_id(0)          # 0 = encode/stats phase, 1 = decode phase
    j = pl.program_id(1)          # vocab tile index
    nv = pl.num_programs(1)
    K = temb_ref.shape[0]

    # ---------------- phase 0: encode + beta-softmax statistics ----------------
    @pl.when(p == 0)
    def _encode_phase():
        @pl.when(j == 0)
        def _init():
            h_acc[...] = jnp.zeros(h_acc.shape, h_acc.dtype)
            m_sc[...] = jnp.full(m_sc.shape, -jnp.inf, m_sc.dtype)
            l_sc[...] = jnp.zeros(l_sc.shape, l_sc.dtype)

        # fc1 partial sum over this vocab tile: (B, tV) x (H, tV)^T -> (B, H)
        h_acc[...] += _dot_nt(x_ref[...], w1_ref[...])

        # Decoder logits tile = topic_emb @ word_emb_tile.T; cache it in VMEM
        # so the decode phase needs neither the matmul nor word_emb again.
        logits = _dot_nt(temb_ref[...], wemb_ref[...])            # (K, tV)
        logit_sc[j] = logits

        # Online row-max / row-exp-sum (flash-style softmax statistics).
        m_tile = jnp.max(logits, axis=-1, keepdims=True)          # (K, 1)
        m_new = jnp.maximum(m_sc[...], m_tile)
        l_sc[...] = (l_sc[...] * jnp.exp(m_sc[...] - m_new)
                     + jnp.sum(jnp.exp(logits - m_new), axis=-1, keepdims=True))
        m_sc[...] = m_new

        @pl.when(j == nv - 1)
        def _finalize_encode():
            # fc1 bias + BatchNorm1d (training-mode batch statistics) + ReLU.
            h_pre = h_acc[...] + b1_ref[...]                      # (B, H)
            mean = jnp.mean(h_pre, axis=0, keepdims=True)
            var = jnp.mean((h_pre - mean) ** 2, axis=0, keepdims=True)
            h = (h_pre - mean) * lax.rsqrt(var + 1e-5)            # rsqrt -> EUP
            h = h * gamma_ref[...] + betabn_ref[...]
            h = jnp.maximum(h, 0.0)

            # One fused matmul for [mu | log_sigma]: (B, H) x (2K, H)^T.
            muls = _dot_nt(h, wmuls_ref[...]) + bmuls_ref[...]    # (B, 2K)
            mu = muls[:, :K]
            log_sigma = muls[:, K:2 * K]

            # Reparameterize + divide-free softmax over topics.
            z = mu + jnp.exp(0.5 * log_sigma) * eps_ref[...]
            z = z - jnp.max(z, axis=-1, keepdims=True)
            theta = jnp.exp(z - jnp.log(jnp.sum(jnp.exp(z), axis=-1,
                                                keepdims=True)))
            theta_sc[...] = theta

            # Packed (B, 3K) output: [mu | log_sigma | theta].
            stats_ref[:, 0:2 * K] = muls
            stats_ref[:, 2 * K:3 * K] = theta

            # Fold log(sum) into the running max so phase 1's beta is simply
            # exp(logits - m_sc): the (K, V) softmax divide disappears.
            m_sc[...] = m_sc[...] + jnp.log(l_sc[...])

    # ---------------- phase 1: decode recon = theta @ beta, tile by tile -------
    @pl.when(p == 1)
    def _decode_phase():
        beta = jnp.exp(logit_sc[j] - m_sc[...])                   # normalized rows
        recon_ref[...] = jnp.dot(theta_sc[...], beta,
                                 preferred_element_type=jnp.float32)


def etm_forward(x, eps, params, *, tile_v=128):
    B, V = x.shape
    H = params["w1"].shape[0]
    K = params["w_mu"].shape[0]
    E = params["topic_emb"].shape[1]

    if V % tile_v != 0:
        tile_v = V                      # fall back to a single vocab tile
    n_v = V // tile_v
    last = n_v - 1                      # phase-1 pin: no redundant input DMAs

    # Fuse fc_mu / fc_log_sigma into one (2K, H) weight and (1, 2K) bias.
    w_muls = jnp.concatenate([params["w_mu"], params["w_ls"]], axis=0)
    b_muls = jnp.concatenate([params["b_mu"], params["b_ls"]]).reshape(1, 2 * K)

    inputs = (
        x, eps,
        params["w1"],                    # (H, V)  consumed as stored (NT dot)
        params["b1"].reshape(1, H),
        params["bn_gamma"].reshape(1, H),
        params["bn_beta"].reshape(1, H),
        w_muls, b_muls,
        params["topic_emb"],             # (K, E)
        params["word_emb"],              # (V, E)  consumed as stored (NT dot)
    )

    in_specs = [
        # phase 0: walk vocab tiles; phase 1: stay on the last block (no DMA).
        pl.BlockSpec((B, tile_v), lambda p, j: (0, j * (1 - p) + last * p)),
        pl.BlockSpec((B, K), lambda p, j: (0, 0)),                  # eps
        pl.BlockSpec((H, tile_v), lambda p, j: (0, j * (1 - p) + last * p)),
        pl.BlockSpec((1, H), lambda p, j: (0, 0)),                  # b1
        pl.BlockSpec((1, H), lambda p, j: (0, 0)),                  # bn gamma
        pl.BlockSpec((1, H), lambda p, j: (0, 0)),                  # bn beta
        pl.BlockSpec((2 * K, H), lambda p, j: (0, 0)),              # [w_mu | w_ls]
        pl.BlockSpec((1, 2 * K), lambda p, j: (0, 0)),              # [b_mu | b_ls]
        pl.BlockSpec((K, E), lambda p, j: (0, 0)),                  # topic_emb
        pl.BlockSpec((tile_v, E), lambda p, j: (j * (1 - p) + last * p, 0)),
    ]
    out_specs = [
        pl.BlockSpec((B, tile_v), lambda p, j: (0, j * p)),         # recon (phase 1)
        pl.BlockSpec((B, 3 * K), lambda p, j: (0, 0)),              # [mu|ls|theta]
    ]
    out_shapes = (
        jax.ShapeDtypeStruct((B, V), jnp.float32),
        jax.ShapeDtypeStruct((B, 3 * K), jnp.float32),
    )

    recon, stats = pl.pallas_call(
        etm_kernel,
        out_shape=out_shapes,
        grid_spec=pltpu.PrefetchScalarGridSpec(
            num_scalar_prefetch=0,
            grid=(2, n_v),
            in_specs=in_specs,
            out_specs=out_specs,
            scratch_shapes=[
                pltpu.VMEM((B, H), jnp.float32),            # fc1 accumulator
                pltpu.VMEM((K, 1), jnp.float32),            # running max (+ log sum)
                pltpu.VMEM((K, 1), jnp.float32),            # running exp-sum
                pltpu.VMEM((B, K), jnp.float32),            # theta for decode phase
                pltpu.VMEM((n_v, K, tile_v), jnp.float32),  # cached decoder logits
            ],
        ),
        compiler_params=pltpu.CompilerParams(
            dimension_semantics=("arbitrary", "arbitrary"),
            vmem_limit_bytes=48 * 1024 * 1024,
        ),
    )(*inputs)

    mu = stats[:, 0:K]
    log_sigma = stats[:, K:2 * K]
    theta = stats[:, 2 * K:3 * K]
    return recon, mu, log_sigma, theta


def etm_reference(x, eps, p):
    h_pre = x @ p["w1"].T + p["b1"]
    mean = jnp.mean(h_pre, axis=0, keepdims=True)
    var = jnp.mean((h_pre - mean) ** 2, axis=0, keepdims=True)
    h = (h_pre - mean) / jnp.sqrt(var + 1e-5) * p["bn_gamma"] + p["bn_beta"]
    h = jnp.maximum(h, 0.0)
    mu = h @ p["w_mu"].T + p["b_mu"]
    log_sigma = h @ p["w_ls"].T + p["b_ls"]
    theta = jax.nn.softmax(mu + jnp.exp(0.5 * log_sigma) * eps, axis=-1)
    beta = jax.nn.softmax(p["topic_emb"] @ p["word_emb"].T, axis=-1)
    return theta @ beta, mu, log_sigma, theta


if __name__ == "__main__":
    # Small, deterministic shapes consistent with the module's forward.
    # V chosen as a multiple of the 128-lane vocab tile so the grid is (2, 4).
    B, V, E, H, K = 8, 512, 128, 128, 16   # batch, vocab, emb_dim, hidden, topics

    key = jax.random.PRNGKey(0)
    keys = jax.random.split(key, 10)

    params = {
        "w1":        jax.random.uniform(keys[0], (H, V), jnp.float32, -0.05, 0.05),
        "b1":        jax.random.uniform(keys[1], (H,),   jnp.float32, -0.05, 0.05),
        "bn_gamma":  jnp.ones((H,), jnp.float32),
        "bn_beta":   jnp.zeros((H,), jnp.float32),
        "w_mu":      jax.random.uniform(keys[2], (K, H), jnp.float32, -0.09, 0.09),
        "b_mu":      jax.random.uniform(keys[3], (K,),   jnp.float32, -0.09, 0.09),
        "w_ls":      jax.random.uniform(keys[4], (K, H), jnp.float32, -0.09, 0.09),
        "b_ls":      jax.random.uniform(keys[5], (K,),   jnp.float32, -0.09, 0.09),
        "topic_emb": jax.random.normal(keys[6], (K, E), jnp.float32),
        "word_emb":  jax.random.uniform(keys[7], (V, E), jnp.float32, -0.05, 0.05),
    }

    # Bag-of-words-like input (non-negative counts) and reparameterization noise.
    x = jnp.floor(jax.random.uniform(keys[8], (B, V), jnp.float32, 0.0, 3.0))
    eps = jax.random.normal(keys[9], (B, K), jnp.float32)

    recon, mu, log_sigma, theta = jax.block_until_ready(
        etm_forward(x, eps, params, tile_v=128))

    r_ref, mu_ref, ls_ref, th_ref = etm_reference(x, eps, params)
    assert jnp.allclose(recon, r_ref, atol=1e-4, rtol=1e-4)
    assert jnp.allclose(mu, mu_ref, atol=1e-4, rtol=1e-4)
    assert jnp.allclose(log_sigma, ls_ref, atol=1e-4, rtol=1e-4)
    assert jnp.allclose(theta, th_ref, atol=1e-4, rtol=1e-4)

    print("KERNEL_OK")
</pallas_src>

<mosaic_0001>
module attributes {stable_mosaic.version = 11 : i64} {
  func.func @etm_kernel(%arg0: i32, %arg1: i32, %arg2: memref<8x128xf32, #tpu.memory_space<vmem>>, %arg3: memref<8x16xf32, #tpu.memory_space<vmem>>, %arg4: memref<128x128xf32, #tpu.memory_space<vmem>>, %arg5: memref<1x128xf32, #tpu.memory_space<vmem>>, %arg6: memref<1x128xf32, #tpu.memory_space<vmem>>, %arg7: memref<1x128xf32, #tpu.memory_space<vmem>>, %arg8: memref<32x128xf32, #tpu.memory_space<vmem>>, %arg9: memref<1x32xf32, #tpu.memory_space<vmem>>, %arg10: memref<16x128xf32, #tpu.memory_space<vmem>>, %arg11: memref<128x128xf32, #tpu.memory_space<vmem>>, %arg12: memref<8x128xf32, #tpu.memory_space<vmem>>, %arg13: memref<8x48xf32, #tpu.memory_space<vmem>>, %arg14: memref<8x128xf32, #tpu.memory_space<vmem>>, %arg15: memref<16x1xf32, #tpu.memory_space<vmem>>, %arg16: memref<16x1xf32, #tpu.memory_space<vmem>>, %arg17: memref<8x16xf32, #tpu.memory_space<vmem>>, %arg18: memref<4x16x128xf32, #tpu.memory_space<vmem>>) attributes {dimension_semantics = [#tpu.dimension_semantics<arbitrary>, #tpu.dimension_semantics<arbitrary>], iteration_bounds = array<i64: 2, 4>, scalar_prefetch = 0 : i64, scratch_operands = 5 : i64, tpu.core_type = #tpu.core_type<tc>, window_params = [{transform_indices = @transform_0, window_bounds = array<i64: 8, 128>}, {pipeline_mode = #tpu.pipeline_mode<synchronous>, transform_indices = @transform_1, window_bounds = array<i64: 8, 16>}, {transform_indices = @transform_2, window_bounds = array<i64: 128, 128>}, {pipeline_mode = #tpu.pipeline_mode<synchronous>, transform_indices = @transform_3, window_bounds = array<i64: 1, 128>}, {pipeline_mode = #tpu.pipeline_mode<synchronous>, transform_indices = @transform_4, window_bounds = array<i64: 1, 128>}, {pipeline_mode = #tpu.pipeline_mode<synchronous>, transform_indices = @transform_5, window_bounds = array<i64: 1, 128>}, {pipeline_mode = #tpu.pipeline_mode<synchronous>, transform_indices = @transform_6, window_bounds = array<i64: 32, 128>}, {pipeline_mode = #tpu.pipeline_mode<synchronous>, transform_indices = @transform_7, window_bounds = array<i64: 1, 32>}, {pipeline_mode = #tpu.pipeline_mode<synchronous>, transform_indices = @transform_8, window_bounds = array<i64: 16, 128>}, {transform_indices = @transform_9, window_bounds = array<i64: 128, 128>}, {transform_indices = @transform_10, window_bounds = array<i64: 8, 128>}, {pipeline_mode = #tpu.pipeline_mode<synchronous>, transform_indices = @transform_11, window_bounds = array<i64: 8, 48>}]} {
    %c0_i32 = arith.constant 0 : i32
    %0 = arith.cmpi eq, %arg0, %c0_i32 : i32
    %1 = arith.extui %0 : i1 to i32
    %c0_i32_0 = arith.constant 0 : i32
    %2 = arith.cmpi ne, %1, %c0_i32_0 : i32
    scf.if %2 {
      %c0_i32_2 = arith.constant 0 : i32
      %6 = arith.cmpi eq, %arg1, %c0_i32_2 : i32
      %7 = arith.extui %6 : i1 to i32
      %c0_i32_3 = arith.constant 0 : i32
      %8 = arith.cmpi ne, %7, %c0_i32_3 : i32
      scf.if %8 {
        %cst_31 = arith.constant 0.000000e+00 : f32
        %42 = vector.broadcast %cst_31 : f32 to vector<8x128xf32>
        %c0_32 = arith.constant 0 : index
        %c0_33 = arith.constant 0 : index
        %43 = vector.load %arg14[%c0_32, %c0_33] : memref<8x128xf32, #tpu.memory_space<vmem>>, vector<8x128xf32>
        tpu.vector_store %arg14[%c0_32, %c0_33], %42 {strides = array<i32>} : memref<8x128xf32, #tpu.memory_space<vmem>>, vector<8x128xf32>,
        %cst_34 = arith.constant 0xFF800000 : f32
        %44 = vector.broadcast %cst_34 : f32 to vector<16x1xf32>
        %c0_35 = arith.constant 0 : index
        %c0_36 = arith.constant 0 : index
        %45 = vector.load %arg15[%c0_35, %c0_36] : memref<16x1xf32, #tpu.memory_space<vmem>>, vector<16x1xf32>
        tpu.vector_store %arg15[%c0_35, %c0_36], %44 {strides = array<i32>} : memref<16x1xf32, #tpu.memory_space<vmem>>, vector<16x1xf32>,
        %cst_37 = arith.constant 0.000000e+00 : f32
        %46 = vector.broadcast %cst_37 : f32 to vector<16x1xf32>
        %c0_38 = arith.constant 0 : index
        %c0_39 = arith.constant 0 : index
        %47 = vector.load %arg16[%c0_38, %c0_39] : memref<16x1xf32, #tpu.memory_space<vmem>>, vector<16x1xf32>
        tpu.vector_store %arg16[%c0_38, %c0_39], %46 {strides = array<i32>} : memref<16x1xf32, #tpu.memory_space<vmem>>, vector<16x1xf32>,
      } else {
      }
      %c0 = arith.constant 0 : index
      %c0_4 = arith.constant 0 : index
      %9 = vector.load %arg14[%c0, %c0_4] : memref<8x128xf32, #tpu.memory_space<vmem>>, vector<8x128xf32>
      %c0_5 = arith.constant 0 : index
      %c0_6 = arith.constant 0 : index
      %10 = vector.load %arg2[%c0_5, %c0_6] : memref<8x128xf32, #tpu.memory_space<vmem>>, vector<8x128xf32>
      %c0_7 = arith.constant 0 : index
      %c0_8 = arith.constant 0 : index
      %11 = vector.load %arg4[%c0_7, %c0_8] : memref<128x128xf32, #tpu.memory_space<vmem>>, vector<128x128xf32>
      %cst = arith.constant dense<0.000000e+00> : vector<8x128xf32>
      %12 = tpu.matmul %10, %11, %cst {dimension_numbers = #tpu.dot_dimension_numbers<[1], [1], [0], [0], [0, 0, 1, 0], [], []>} : vector<8x128xf32>, vector<128x128xf32>, vector<8x128xf32> -> vector<8x128xf32>
      %13 = arith.addf %9, %12 : vector<8x128xf32>
      %c0_9 = arith.constant 0 : index
      %c0_10 = arith.constant 0 : index
      %14 = vector.load %arg14[%c0_9, %c0_10] : memref<8x128xf32, #tpu.memory_space<vmem>>, vector<8x128xf32>
      tpu.vector_store %arg14[%c0_9, %c0_10], %13 {strides = array<i32>} : memref<8x128xf32, #tpu.memory_space<vmem>>, vector<8x128xf32>,
      %c0_11 = arith.constant 0 : index
      %c0_12 = arith.constant 0 : index
      %15 = vector.load %arg10[%c0_11, %c0_12] : memref<16x128xf32, #tpu.memory_space<vmem>>, vector<16x128xf32>
      %c0_13 = arith.constant 0 : index
      %c0_14 = arith.constant 0 : index
      %16 = vector.load %arg11[%c0_13, %c0_14] : memref<128x128xf32, #tpu.memory_space<vmem>>, vector<128x128xf32>
      %cst_15 = arith.constant dense<0.000000e+00> : vector<16x128xf32>
      %17 = tpu.matmul %15, %16, %cst_15 {dimension_numbers = #tpu.dot_dimension_numbers<[1], [1], [0], [0], [0, 0, 1, 0], [], []>} : vector<16x128xf32>, vector<128x128xf32>, vector<16x128xf32> -> vector<16x128xf32>
      %18 = arith.index_cast %arg1 : i32 to index
      %c0_16 = arith.constant 0 : index
      %c0_17 = arith.constant 0 : index
      %19 = vector.load %arg18[%18, %c0_16, %c0_17] : memref<4x16x128xf32, #tpu.memory_space<vmem>>, vector<1x16x128xf32>
      %20 = vector.shape_cast %19 : vector<1x16x128xf32> to vector<16x128xf32>
      %21 = vector.shape_cast %17 : vector<16x128xf32> to vector<1x16x128xf32>
      tpu.vector_store %arg18[%18, %c0_16, %c0_17], %21 {strides = array<i32>} : memref<4x16x128xf32, #tpu.memory_space<vmem>>, vector<1x16x128xf32>,
      %cst_18 = arith.constant dense<0xFF800000> : vector<16xf32>
      %22 = vector.multi_reduction <maximumf>, %17, %cst_18 [1] : vector<16x128xf32> to vector<16xf32>
      %23 = vector.shape_cast %22 : vector<16xf32> to vector<16x1xf32>
      %c0_19 = arith.constant 0 : index
      %c0_20 = arith.constant 0 : index
      %24 = vector.load %arg15[%c0_19, %c0_20] : memref<16x1xf32, #tpu.memory_space<vmem>>, vector<16x1xf32>
      %25 = arith.maximumf %24, %23 : vector<16x1xf32>
      %c0_21 = arith.constant 0 : index
      %c0_22 = arith.constant 0 : index
      %26 = vector.load %arg16[%c0_21, %c0_22] : memref<16x1xf32, #tpu.memory_space<vmem>>, vector<16x1xf32>
      %c0_23 = arith.constant 0 : index
      %c0_24 = arith.constant 0 : index
      %27 = vector.load %arg15[%c0_23, %c0_24] : memref<16x1xf32, #tpu.memory_space<vmem>>, vector<16x1xf32>
      %28 = arith.subf %27, %25 : vector<16x1xf32>
      %29 = math.exp %28 : vector<16x1xf32>
      %30 = arith.mulf %26, %29 : vector<16x1xf32>
      %31 = vector.broadcast %25 : vector<16x1xf32> to vector<16x128xf32>
      %32 = arith.subf %17, %31 : vector<16x128xf32>
      %33 = math.exp %32 : vector<16x128xf32>
      %cst_25 = arith.constant dense<0.000000e+00> : vector<16xf32>
      %34 = vector.multi_reduction <add>, %33, %cst_25 [1] : vector<16x128xf32> to vector<16xf32>
      %35 = vector.shape_cast %34 : vector<16xf32> to vector<16x1xf32>
      %36 = arith.addf %30, %35 : vector<16x1xf32>
      %c0_26 = arith.constant 0 : index
      %c0_27 = arith.constant 0 : index
      %37 = vector.load %arg16[%c0_26, %c0_27] : memref<16x1xf32, #tpu.memory_space<vmem>>, vector<16x1xf32>
      tpu.vector_store %arg16[%c0_26, %c0_27], %36 {strides = array<i32>} : memref<16x1xf32, #tpu.memory_space<vmem>>, vector<16x1xf32>,
      %c0_28 = arith.constant 0 : index
      %c0_29 = arith.constant 0 : index
      %38 = vector.load %arg15[%c0_28, %c0_29] : memref<16x1xf32, #tpu.memory_space<vmem>>, vector<16x1xf32>
      tpu.vector_store %arg15[%c0_28, %c0_29], %25 {strides = array<i32>} : memref<16x1xf32, #tpu.memory_space<vmem>>, vector<16x1xf32>,
      %c3_i32 = arith.constant 3 : i32
      %39 = arith.cmpi eq, %arg1, %c3_i32 : i32
      %40 = arith.extui %39 : i1 to i32
      %c0_i32_30 = arith.constant 0 : i32
      %41 = arith.cmpi ne, %40, %c0_i32_30 : i32
      scf.if %41 {
        %c0_31 = arith.constant 0 : index
        %c0_32 = arith.constant 0 : index
        %42 = vector.load %arg14[%c0_31, %c0_32] : memref<8x128xf32, #tpu.memory_space<vmem>>, vector<8x128xf32>
        %c0_33 = arith.constant 0 : index
        %c0_34 = arith.constant 0 : index
        %43 = vector.load %arg5[%c0_33, %c0_34] : memref<1x128xf32, #tpu.memory_space<vmem>>, vector<1x128xf32>
        %44 = vector.broadcast %43 : vector<1x128xf32> to vector<8x128xf32>
        %45 = arith.addf %42, %44 : vector<8x128xf32>
        %cst_35 = arith.constant dense<0.000000e+00> : vector<128xf32>
        %46 = vector.multi_reduction <add>, %45, %cst_35 [0] : vector<8x128xf32> to vector<128xf32>
        %47 = vector.shape_cast %46 : vector<128xf32> to vector<1x128xf32>
        %cst_36 = arith.constant 8.000000e+00 : f32
        %48 = vector.broadcast %cst_36 : f32 to vector<1x128xf32>
        %49 = arith.divf %47, %48 : vector<1x128xf32>
        %50 = vector.broadcast %49 : vector<1x128xf32> to vector<8x128xf32>
        %51 = arith.subf %45, %50 : vector<8x128xf32>
        %52 = arith.mulf %51, %51 : vector<8x128xf32>
        %cst_37 = arith.constant dense<0.000000e+00> : vector<128xf32>
        %53 = vector.multi_reduction <add>, %52, %cst_37 [0] : vector<8x128xf32> to vector<128xf32>
        %54 = vector.shape_cast %53 : vector<128xf32> to vector<1x128xf32>
        %cst_38 = arith.constant 8.000000e+00 : f32
        %55 = vector.broadcast %cst_38 : f32 to vector<1x128xf32>
        %56 = arith.divf %54, %55 : vector<1x128xf32>
        %57 = vector.broadcast %49 : vector<1x128xf32> to vector<8x128xf32>
        %58 = arith.subf %45, %57 : vector<8x128xf32>
        %cst_39 = arith.constant 9.99999974E-6 : f32
        %59 = vector.broadcast %cst_39 : f32 to vector<1x128xf32>
        %60 = arith.addf %56, %59 : vector<1x128xf32>
        %61 = math.rsqrt %60 : vector<1x128xf32>
        %62 = vector.broadcast %61 : vector<1x128xf32> to vector<8x128xf32>
        %63 = arith.mulf %58, %62 : vector<8x128xf32>
        %c0_40 = arith.constant 0 : index
        %c0_41 = arith.constant 0 : index
        %64 = vector.load %arg6[%c0_40, %c0_41] : memref<1x128xf32, #tpu.memory_space<vmem>>, vector<1x128xf32>
        %65 = vector.broadcast %64 : vector<1x128xf32> to vector<8x128xf32>
        %66 = arith.mulf %63, %65 : vector<8x128xf32>
        %c0_42 = arith.constant 0 : index
        %c0_43 = arith.constant 0 : index
        %67 = vector.load %arg7[%c0_42, %c0_43] : memref<1x128xf32, #tpu.memory_space<vmem>>, vector<1x128xf32>
        %68 = vector.broadcast %67 : vector<1x128xf32> to vector<8x128xf32>
        %69 = arith.addf %66, %68 : vector<8x128xf32>
        %cst_44 = arith.constant 0.000000e+00 : f32
        %70 = vector.broadcast %cst_44 : f32 to vector<8x128xf32>
        %71 = arith.maximumf %69, %70 : vector<8x128xf32>
        %c0_45 = arith.constant 0 : index
        %c0_46 = arith.constant 0 : index
        %72 = vector.load %arg8[%c0_45, %c0_46] : memref<32x128xf32, #tpu.memory_space<vmem>>, vector<32x128xf32>
        %cst_47 = arith.constant dense<0.000000e+00> : vector<8x32xf32>
        %73 = tpu.matmul %71, %72, %cst_47 {dimension_numbers = #tpu.dot_dimension_numbers<[1], [1], [0], [0], [0, 0, 1, 0], [], []>} : vector<8x128xf32>, vector<32x128xf32>, vector<8x32xf32> -> vector<8x32xf32>
        %c0_48 = arith.constant 0 : index
        %c0_49 = arith.constant 0 : index
        %74 = vector.load %arg9[%c0_48, %c0_49] : memref<1x32xf32, #tpu.memory_space<vmem>>, vector<1x32xf32>
        %75 = vector.broadcast %74 : vector<1x32xf32> to vector<8x32xf32>
        %76 = arith.addf %73, %75 : vector<8x32xf32>
        %77 = vector.extract_strided_slice %76 {offsets = [0, 0], sizes = [8, 16], strides = [1, 1]} : vector<8x32xf32> to vector<8x16xf32>
        %78 = vector.extract_strided_slice %76 {offsets = [0, 16], sizes = [8, 16], strides = [1, 1]} : vector<8x32xf32> to vector<8x16xf32>
        %cst_50 = arith.constant 5.000000e-01 : f32
        %79 = vector.broadcast %cst_50 : f32 to vector<8x16xf32>
        %80 = arith.mulf %79, %78 : vector<8x16xf32>
        %81 = math.exp %80 : vector<8x16xf32>
        %c0_51 = arith.constant 0 : index
        %c0_52 = arith.constant 0 : index
        %82 = vector.load %arg3[%c0_51, %c0_52] : memref<8x16xf32, #tpu.memory_space<vmem>>, vector<8x16xf32>
        %83 = arith.mulf %81, %82 : vector<8x16xf32>
        %84 = arith.addf %77, %83 : vector<8x16xf32>
        %cst_53 = arith.constant dense<0xFF800000> : vector<8xf32>
        %85 = vector.multi_reduction <maximumf>, %84, %cst_53 [1] : vector<8x16xf32> to vector<8xf32>
        %86 = vector.shape_cast %85 : vector<8xf32> to vector<8x1xf32>
        %87 = vector.broadcast %86 : vector<8x1xf32> to vector<8x16xf32>
        %88 = arith.subf %84, %87 : vector<8x16xf32>
        %89 = math.exp %88 : vector<8x16xf32>
        %cst_54 = arith.constant dense<0.000000e+00> : vector<8xf32>
        %90 = vector.multi_reduction <add>, %89, %cst_54 [1] : vector<8x16xf32> to vector<8xf32>
        %91 = vector.shape_cast %90 : vector<8xf32> to vector<8x1xf32>
        %92 = math.log %91 : vector<8x1xf32>
        %93 = vector.broadcast %92 : vector<8x1xf32> to vector<8x16xf32>
        %94 = arith.subf %88, %93 : vector<8x16xf32>
        %95 = math.exp %94 : vector<8x16xf32>
        %c0_55 = arith.constant 0 : index
        %c0_56 = arith.constant 0 : index
        %96 = vector.load %arg17[%c0_55, %c0_56] : memref<8x16xf32, #tpu.memory_space<vmem>>, vector<8x16xf32>
        tpu.vector_store %arg17[%c0_55, %c0_56], %95 {strides = array<i32>} : memref<8x16xf32, #tpu.memory_space<vmem>>, vector<8x16xf32>,
        %c0_57 = arith.constant 0 : index
        %c0_58 = arith.constant 0 : index
        %97 = vector.load %arg13[%c0_57, %c0_58] : memref<8x48xf32, #tpu.memory_space<vmem>>, vector<8x32xf32>
        tpu.vector_store %arg13[%c0_57, %c0_58], %76 {strides = array<i32>} : memref<8x48xf32, #tpu.memory_space<vmem>>, vector<8x32xf32>,
        %c0_59 = arith.constant 0 : index
        %c32 = arith.constant 32 : index
        %98 = vector.load %arg13[%c0_59, %c32] : memref<8x48xf32, #tpu.memory_space<vmem>>, vector<8x16xf32>
        tpu.vector_store %arg13[%c0_59, %c32], %95 {strides = array<i32>} : memref<8x48xf32, #tpu.memory_space<vmem>>, vector<8x16xf32>,
        %c0_60 = arith.constant 0 : index
        %c0_61 = arith.constant 0 : index
        %99 = vector.load %arg15[%c0_60, %c0_61] : memref<16x1xf32, #tpu.memory_space<vmem>>, vector<16x1xf32>
        %c0_62 = arith.constant 0 : index
        %c0_63 = arith.constant 0 : index
        %100 = vector.load %arg16[%c0_62, %c0_63] : memref<16x1xf32, #tpu.memory_space<vmem>>, vector<16x1xf32>
        %101 = math.log %100 : vector<16x1xf32>
        %102 = arith.addf %99, %101 : vector<16x1xf32>
        %c0_64 = arith.constant 0 : index
        %c0_65 = arith.constant 0 : index
        %103 = vector.load %arg15[%c0_64, %c0_65] : memref<16x1xf32, #tpu.memory_space<vmem>>, vector<16x1xf32>
        tpu.vector_store %arg15[%c0_64, %c0_65], %102 {strides = array<i32>} : memref<16x1xf32, #tpu.memory_space<vmem>>, vector<16x1xf32>,
      } else {
      }
    } else {
    }
    %c1_i32 = arith.constant 1 : i32
    %3 = arith.cmpi eq, %arg0, %c1_i32 : i32
    %4 = arith.extui %3 : i1 to i32
    %c0_i32_1 = arith.constant 0 : i32
    %5 = arith.cmpi ne, %4, %c0_i32_1 : i32
    scf.if %5 {
      %6 = arith.index_cast %arg1 : i32 to index
      %c0 = arith.constant 0 : index
      %c0_2 = arith.constant 0 : index
      %7 = vector.load %arg18[%6, %c0, %c0_2] : memref<4x16x128xf32, #tpu.memory_space<vmem>>, vector<1x16x128xf32>
      %8 = vector.shape_cast %7 : vector<1x16x128xf32> to vector<16x128xf32>
      %c0_3 = arith.constant 0 : index
      %c0_4 = arith.constant 0 : index
      %9 = vector.load %arg15[%c0_3, %c0_4] : memref<16x1xf32, #tpu.memory_space<vmem>>, vector<16x1xf32>
      %10 = vector.broadcast %9 : vector<16x1xf32> to vector<16x128xf32>
      %11 = arith.subf %8, %10 : vector<16x128xf32>
      %12 = math.exp %11 : vector<16x128xf32>
      %c0_5 = arith.constant 0 : index
      %c0_6 = arith.constant 0 : index
      %13 = vector.load %arg17[%c0_5, %c0_6] : memref<8x16xf32, #tpu.memory_space<vmem>>, vector<8x16xf32>
      %cst = arith.constant dense<0.000000e+00> : vector<8x128xf32>
      %14 = tpu.matmul %13, %12, %cst {dimension_numbers = #tpu.dot_dimension_numbers<[1], [0], [0], [1], [0, 0, 1, 1], [], []>} : vector<8x16xf32>, vector<16x128xf32>, vector<8x128xf32> -> vector<8x128xf32>
      %c0_7 = arith.constant 0 : index
      %c0_8 = arith.constant 0 : index
      %15 = vector.load %arg12[%c0_7, %c0_8] : memref<8x128xf32, #tpu.memory_space<vmem>>, vector<8x128xf32>
      tpu.vector_store %arg12[%c0_7, %c0_8], %14 {strides = array<i32>} : memref<8x128xf32, #tpu.memory_space<vmem>>, vector<8x128xf32>,
    } else {
    }
    return
  }
  func.func @transform_0(%arg0: i32, %arg1: i32) -> (i32, i32) {
    %c1_i32 = arith.constant 1 : i32
    %0 = arith.subi %c1_i32, %arg0 : i32
    %1 = arith.muli %arg1, %0 : i32
    %c3_i32 = arith.constant 3 : i32
    %2 = arith.muli %c3_i32, %arg0 : i32
    %3 = arith.addi %1, %2 : i32
    %c0_i32 = arith.constant 0 : i32
    %c0_i32_0 = arith.constant 0 : i32
    return %c0_i32, %3 : i32, i32
  }
  func.func @transform_1(%arg0: i32, %arg1: i32) -> (i32, i32) {
    %c0_i32 = arith.constant 0 : i32
    %c0_i32_0 = arith.constant 0 : i32
    %c0_i32_1 = arith.constant 0 : i32
    return %c0_i32, %c0_i32_0 : i32, i32
  }
  func.func @transform_2(%arg0: i32, %arg1: i32) -> (i32, i32) {
    %c1_i32 = arith.constant 1 : i32
    %0 = arith.subi %c1_i32, %arg0 : i32
    %1 = arith.muli %arg1, %0 : i32
    %c3_i32 = arith.constant 3 : i32
    %2 = arith.muli %c3_i32, %arg0 : i32
    %3 = arith.addi %1, %2 : i32
    %c0_i32 = arith.constant 0 : i32
    %c0_i32_0 = arith.constant 0 : i32
    return %c0_i32, %3 : i32, i32
  }
  func.func @transform_3(%arg0: i32, %arg1: i32) -> (i32, i32) {
    %c0_i32 = arith.constant 0 : i32
    %c0_i32_0 = arith.constant 0 : i32
    %c0_i32_1 = arith.constant 0 : i32
    return %c0_i32, %c0_i32_0 : i32, i32
  }
  func.func @transform_4(%arg0: i32, %arg1: i32) -> (i32, i32) {
    %c0_i32 = arith.constant 0 : i32
    %c0_i32_0 = arith.constant 0 : i32
    %c0_i32_1 = arith.constant 0 : i32
    return %c0_i32, %c0_i32_0 : i32, i32
  }
  func.func @transform_5(%arg0: i32, %arg1: i32) -> (i32, i32) {
    %c0_i32 = arith.constant 0 : i32
    %c0_i32_0 = arith.constant 0 : i32
    %c0_i32_1 = arith.constant 0 : i32
    return %c0_i32, %c0_i32_0 : i32, i32
  }
  func.func @transform_6(%arg0: i32, %arg1: i32) -> (i32, i32) {
    %c0_i32 = arith.constant 0 : i32
    %c0_i32_0 = arith.constant 0 : i32
    %c0_i32_1 = arith.constant 0 : i32
    return %c0_i32, %c0_i32_0 : i32, i32
  }
  func.func @transform_7(%arg0: i32, %arg1: i32) -> (i32, i32) {
    %c0_i32 = arith.constant 0 : i32
    %c0_i32_0 = arith.constant 0 : i32
    %c0_i32_1 = arith.constant 0 : i32
    return %c0_i32, %c0_i32_0 : i32, i32
  }
  func.func @transform_8(%arg0: i32, %arg1: i32) -> (i32, i32) {
    %c0_i32 = arith.constant 0 : i32
    %c0_i32_0 = arith.constant 0 : i32
    %c0_i32_1 = arith.constant 0 : i32
    return %c0_i32, %c0_i32_0 : i32, i32
  }
  func.func @transform_9(%arg0: i32, %arg1: i32) -> (i32, i32) {
    %c1_i32 = arith.constant 1 : i32
    %0 = arith.subi %c1_i32, %arg0 : i32
    %1 = arith.muli %arg1, %0 : i32
    %c3_i32 = arith.constant 3 : i32
    %2 = arith.muli %c3_i32, %arg0 : i32
    %3 = arith.addi %1, %2 : i32
    %c0_i32 = arith.constant 0 : i32
    %c0_i32_0 = arith.constant 0 : i32
    return %3, %c0_i32 : i32, i32
  }
  func.func @transform_10(%arg0: i32, %arg1: i32) -> (i32, i32) {
    %0 = arith.muli %arg1, %arg0 : i32
    %c0_i32 = arith.constant 0 : i32
    %c0_i32_0 = arith.constant 0 : i32
    return %c0_i32, %0 : i32, i32
  }
  func.func @transform_11(%arg0: i32, %arg1: i32) -> (i32, i32) {
    %c0_i32 = arith.constant 0 : i32
    %c0_i32_0 = arith.constant 0 : i32
    %c0_i32_1 = arith.constant 0 : i32
    return %c0_i32, %c0_i32_0 : i32, i32
  }
}

</mosaic_0001>

<llo_original>
// kernel: tpu_custom_call.1
$region0: #{tpu_custom_call.1}
  #allocation0 [shape = 'u32[]', space=smem, size = 0x4, offset = 0x4, fixed_abs, tag = 'smem constant byte address 0x4 - core index']
  #allocation1 [shape = 'u32[144,128]{1,0:T(1,128)}', space=vmem, size = 0x12000, scoped, tag = 'internal scratch']
  #allocation2 [shape = 'f32[8,128]{1,0:T(8,128)}', space=vmem, size = 0x1000, scoped, tag = 'scratch operand']
  #allocation3 [shape = 'f32[16,1]{1,0:T(8,128)}', space=vmem, size = 0x2000, scoped, tag = 'scratch operand']
  #allocation4 [shape = 'f32[16,1]{1,0:T(8,128)}', space=vmem, size = 0x2000, scoped, tag = 'scratch operand']
  #allocation5 [shape = 'f32[8,16]{1,0:T(8,128)}', space=vmem, size = 0x1000, scoped, tag = 'scratch operand']
  #allocation6 [shape = 'f32[4,16,128]{2,1,0:T(8,128)}', space=vmem, size = 0x8000, scoped, tag = 'scratch operand']
  %s0 = inlined_call_operand.hbm [shape: f32[8,512], index: 0, kind: input, shape index: {}]
  %s1 = inlined_call_operand.hbm [shape: f32[8,16], index: 1, kind: input, shape index: {}]
  %s2 = inlined_call_operand.hbm [shape: f32[128,512], index: 2, kind: input, shape index: {}]
  %s3 = inlined_call_operand.vmem [shape: f32[1,128], index: 3, kind: input, shape index: {}]
  %s4 = inlined_call_operand.vmem [shape: f32[1,128], index: 4, kind: input, shape index: {}]
  %s5 = inlined_call_operand.vmem [shape: f32[1,128], index: 5, kind: input, shape index: {}]
  %s6 = inlined_call_operand.hbm [shape: f32[32,128], index: 6, kind: input, shape index: {}]
  %s7 = inlined_call_operand.vmem [shape: f32[1,32], index: 7, kind: input, shape index: {}]
  %s8 = inlined_call_operand.hbm [shape: f32[16,128], index: 8, kind: input, shape index: {}]
  %s9 = inlined_call_operand.hbm [shape: f32[512,128], index: 9, kind: input, shape index: {}]
  %s10 = inlined_call_operand.hbm [shape: f32[8,512], index: 10, kind: output, shape index: {0}]
  %s11 = inlined_call_operand.hbm [shape: f32[8,48], index: 11, kind: output, shape index: {1}]
  %12 = xla_tuple %s10, %s11
  %s13 = sld [smem:[#allocation0]]
  $region121: #{tpu_custom_call.1} parent=0
    _
  %s15 = ssub.s32 1, %s13
  %s16 = scalar_select 0, %s15, %s13
  $region1: #{tpu_custom_call.1} parent=0
    #allocation7 [shape = 'u8[8192]{0}', space=vmem, size = 0x2000, scoped, tag = 'input window, operand 0']
    #allocation8 [shape = 's32[2]{0}', space=sflag, size = 0x8, scoped, tag = 'scoped memory for tpu_custom_call.1']
    #allocation9 [shape = 's32[2]{0}', space=sflag, size = 0x8, scoped, tag = 'scoped memory for tpu_custom_call.1']
    #allocation10 [shape = 'u8[4096]{0}', space=vmem, size = 0x1000, scoped, tag = 'input window, operand 1, single buffered']
    #allocation11 [shape = 's32[1]{0}', space=sflag, size = 0x4, scoped, tag = 'scoped memory for tpu_custom_call.1']
    #allocation12 [shape = 'u8[131072]{0}', space=vmem, size = 0x20000, scoped, tag = 'input window, operand 2']
    #allocation13 [shape = 'u8[16384]{0}', space=vmem, size = 0x4000, scoped, tag = 'input window, operand 6, single buffered']
    #allocation14 [shape = 'u8[8192]{0}', space=vmem, size = 0x2000, scoped, tag = 'input window, operand 8, single buffered']
    #allocation15 [shape = 's32[1]{0}', space=sflag, size = 0x4, scoped, tag = 'scoped memory for tpu_custom_call.1']
    #allocation16 [shape = 'u8[131072]{0}', space=vmem, size = 0x20000, scoped, tag = 'input window, operand 9']
    #allocation17 [shape = 'u8[8192]{0}', space=vmem, size = 0x2000, scoped, tag = 'output window, operand 0']
    #allocation18 [shape = 'u8[4096]{0}', space=vmem, size = 0x1000, scoped, tag = 'output window, operand 1, single buffered']
    #allocation19 [shape = 's32[1]{0}', space=sflag, size = 0x4, scoped, tag = 'scoped memory for tpu_custom_call.1']
    %17 = vsyncpa [#allocation8], 0
    %s18 = scalar_lea.sflag [#allocation8], 1
    %19 = vsyncpa %s18, 0
    %20 = vsyncpa [#allocation11], 0
    %21 = vsyncpa [#allocation15], 0
    %22 = vsyncpa [#allocation9], 0
    %s23 = scalar_lea.sflag [#allocation9], 1
    %24 = vsyncpa %s23, 0
    %25 = vsyncpa [#allocation19], 0
    loop: start=0, step=1, limit=10
    $region2: #{tpu_custom_call.1} parent=1 // loop_pre_header
      _
    $region3: #{tpu_custom_call.1} parent=1 // loop_header
      %s27 = sphi 0, %s31
      %p28 = scmp.ge.s32.totalorder %s27, 10
      %s34 = sphi 0, %s46
      %s35 = sphi 0, %s42
      %s36 = sphi 0, %s34
      %s37 = sphi 0, %s35
      %s38 = sphi 0, %s36
      %s39 = sphi 0, %s37
      %s57 = sphi 0, %s59
      %s60 = sphi 0, %s57
      %s61 = sphi 0, %s60
      %s77 = sphi 0, %s61
      %s81 = sphi 0, %s81
      %s83 = sphi 0, %s81
      %s84 = sphi 0, %s83
      %s98 = sphi 0, %s84
      %s112 = sphi 0, %s114
      %s115 = sphi 0, %s112
      %s116 = sphi 0, %s115
      %s132 = sphi 0, %s116
      %s136 = sphi 0, %s136
      %s138 = sphi 0, %s136
      %s139 = sphi 0, %s138
      %s153 = sphi 0, %s139
      %s157 = sphi 0, %s157
      %s159 = sphi 0, %s157
      %s160 = sphi 0, %s159
      %s174 = sphi 0, %s160
      %s178 = sphi 0, %s178
      %s180 = sphi 0, %s178
      %s181 = sphi 0, %s180
      %s195 = sphi 0, %s181
      %s199 = sphi 0, %s199
      %s201 = sphi 0, %s199
      %s202 = sphi 0, %s201
      %s216 = sphi 0, %s202
      %s220 = sphi 0, %s220
      %s222 = sphi 0, %s220
      %s223 = sphi 0, %s222
      %s237 = sphi 0, %s223
      %s241 = sphi 0, %s241
      %s243 = sphi 0, %s241
      %s244 = sphi 0, %s243
      %s258 = sphi 0, %s244
      %s272 = sphi 0, %s274
      %s275 = sphi 0, %s272
      %s276 = sphi 0, %s275
      %s292 = sphi 0, %s276
      %s300 = sphi 0, %s302
      %s303 = sphi 0, %s300
      %s304 = sphi 0, %s303
      %s320 = sphi 0, %s304
      %s324 = sphi 0, %s324
      %s326 = sphi 0, %s324
      %s327 = sphi 0, %s326
      %s341 = sphi 0, %s327
    $region4: #{tpu_custom_call.1} parent=1 // loop_header_branch
      %30 = sbr.rel (%p28) target = $region8
    $region5: #{tpu_custom_call.1} parent=1 // loop_body
      %s32 = ssub.s32 %s27, 1
      %s33 = ssub.s32 %s27, 2
      %s40 = sadd.s32 1, %s35
      %p41 = scmp.ge.s32.totalorder %s40, 4
      %s42 = scalar_select %p41, 0, %s40
      %s43 = sadd.s32 1, %s34
      %s44 = scalar_select %p41, %s43, %s34
      %p45 = scmp.ge.s32.totalorder %s44, 2
      %s46 = scalar_select %p45, 0, %s44
      %s47 = ssub.s32 1, %s34
      %s48 = smul.u32 %s35, %s47
      %s49 = smul.u32 %s34, 3
      %s50 = sadd.s32 %s48, %s49
      %s51 = ssub.s32 1, %s46
      %s52 = smul.u32 %s42, %s51
      %s53 = smul.u32 %s46, 3
      %s54 = sadd.s32 %s52, %s53
      %s55 = ssub.s32 %s50, %s54
      %p56 = scmp.eq.s32.totalorder %s55, 0
      %s58 = sadd.s32 %s57, 1
      %s59 = scalar_select %p56, %s57, %s58
      %p62 = pneg %p56
      %p63 = scmp.eq.s32.totalorder %s27, 7
      %p64 = por %p62, %p63
      %p65 = scmp.ne.s32.totalorder %s57, %s60
      %p66 = scmp.eq.s32.totalorder %s27, 0
      %p67 = por %p65, %p66
      %p68 = scmp.ne.s32.totalorder %s57, %s60
      %p69 = scmp.eq.s32.totalorder %s32, 7
      %p70 = por %p68, %p69
      %p71 = scmp.ne.s32.totalorder %s60, %s61
      %p72 = scmp.eq.s32.totalorder %s32, 0
      %p73 = por %p71, %p72
      %p74 = scmp.ne.s32.totalorder %s60, %s61
      %p75 = scmp.eq.s32.totalorder %s33, 7
      %p76 = por %p74, %p75
      %p78 = scmp.ne.s32.totalorder %s61, %s77
      %p79 = scmp.eq.s32.totalorder %s33, 0
      %p80 = por %p78, %p79
      %s82 = sadd.s32 %s81, 1
      %p85 = scmp.eq.s32.totalorder %s27, 7
      %p86 = scmp.ne.s32.totalorder %s81, %s83
      %p87 = scmp.eq.s32.totalorder %s27, 0
      %p88 = por %p86, %p87
      %p89 = scmp.ne.s32.totalorder %s81, %s83
      %p90 = scmp.eq.s32.totalorder %s32, 7
      %p91 = por %p89, %p90
      %p92 = scmp.ne.s32.totalorder %s83, %s84
      %p93 = scmp.eq.s32.totalorder %s32, 0
      %p94 = por %p92, %p93
      %p95 = scmp.ne.s32.totalorder %s83, %s84
      %p96 = scmp.eq.s32.totalorder %s33, 7
      %p97 = por %p95, %p96
      %p99 = scmp.ne.s32.totalorder %s84, %s98
      %p100 = scmp.eq.s32.totalorder %s33, 0
      %p101 = por %p99, %p100
      %s102 = ssub.s32 1, %s34
      %s103 = smul.u32 %s35, %s102
      %s104 = smul.u32 %s34, 3
      %s105 = sadd.s32 %s103, %s104
      %s106 = ssub.s32 1, %s46
      %s107 = smul.u32 %s42, %s106
      %s108 = smul.u32 %s46, 3
      %s109 = sadd.s32 %s107, %s108
      %s110 = ssub.s32 %s105, %s109
      %p111 = scmp.eq.s32.totalorder %s110, 0
      %s113 = sadd.s32 %s112, 1
      %s114 = scalar_select %p111, %s112, %s113
      %p117 = pneg %p111
      %p118 = scmp.eq.s32.totalorder %s27, 7
      %p119 = por %p117, %p118
      %p120 = scmp.ne.s32.totalorder %s112, %s115
      %p121 = scmp.eq.s32.totalorder %s27, 0
      %p122 = por %p120, %p121
      %p123 = scmp.ne.s32.totalorder %s112, %s115
      %p124 = scmp.eq.s32.totalorder %s32, 7
      %p125 = por %p123, %p124
      %p126 = scmp.ne.s32.totalorder %s115, %s116
      %p127 = scmp.eq.s32.totalorder %s32, 0
      %p128 = por %p126, %p127
      %p129 = scmp.ne.s32.totalorder %s115, %s116
      %p130 = scmp.eq.s32.totalorder %s33, 7
      %p131 = por %p129, %p130
      %p133 = scmp.ne.s32.totalorder %s116, %s132
      %p134 = scmp.eq.s32.totalorder %s33, 0
      %p135 = por %p133, %p134
      %s137 = sadd.s32 %s136, 1
      %p140 = scmp.eq.s32.totalorder %s27, 7
      %p141 = scmp.ne.s32.totalorder %s136, %s138
      %p142 = scmp.eq.s32.totalorder %s27, 0
      %p143 = por %p141, %p142
      %p144 = scmp.ne.s32.totalorder %s136, %s138
      %p145 = scmp.eq.s32.totalorder %s32, 7
      %p146 = por %p144, %p145
      %p147 = scmp.ne.s32.totalorder %s138, %s139
      %p148 = scmp.eq.s32.totalorder %s32, 0
      %p149 = por %p147, %p148
      %p150 = scmp.ne.s32.totalorder %s138, %s139
      %p151 = scmp.eq.s32.totalorder %s33, 7
      %p152 = por %p150, %p151
      %p154 = scmp.ne.s32.totalorder %s139, %s153
      %p155 = scmp.eq.s32.totalorder %s33, 0
      %p156 = por %p154, %p155
      %s158 = sadd.s32 %s157, 1
      %p161 = scmp.eq.s32.totalorder %s27, 7
      %p162 = scmp.ne.s32.totalorder %s157, %s159
      %p163 = scmp.eq.s32.totalorder %s27, 0
      %p164 = por %p162, %p163
      %p165 = scmp.ne.s32.totalorder %s157, %s159
      %p166 = scmp.eq.s32.totalorder %s32, 7
      %p167 = por %p165, %p166
      %p168 = scmp.ne.s32.totalorder %s159, %s160
      %p169 = scmp.eq.s32.totalorder %s32, 0
      %p170 = por %p168, %p169
      %p171 = scmp.ne.s32.totalorder %s159, %s160
      %p172 = scmp.eq.s32.totalorder %s33, 7
      %p173 = por %p171, %p172
      %p175 = scmp.ne.s32.totalorder %s160, %s174
      %p176 = scmp.eq.s32.totalorder %s33, 0
      %p177 = por %p175, %p176
      %s179 = sadd.s32 %s178, 1
      %p182 = scmp.eq.s32.totalorder %s27, 7
      %p183 = scmp.ne.s32.totalorder %s178, %s180
      %p184 = scmp.eq.s32.totalorder %s27, 0
      %p185 = por %p183, %p184
      %p186 = scmp.ne.s32.totalorder %s178, %s180
      %p187 = scmp.eq.s32.totalorder %s32, 7
      %p188 = por %p186, %p187
      %p189 = scmp.ne.s32.totalorder %s180, %s181
      %p190 = scmp.eq.s32.totalorder %s32, 0
      %p191 = por %p189, %p190
      %p192 = scmp.ne.s32.totalorder %s180, %s181
      %p193 = scmp.eq.s32.totalorder %s33, 7
      %p194 = por %p192, %p193
      %p196 = scmp.ne.s32.totalorder %s181, %s195
      %p197 = scmp.eq.s32.totalorder %s33, 0
      %p198 = por %p196, %p197
      %s200 = sadd.s32 %s199, 1
      %p203 = scmp.eq.s32.totalorder %s27, 7
      %p204 = scmp.ne.s32.totalorder %s199, %s201
      %p205 = scmp.eq.s32.totalorder %s27, 0
      %p206 = por %p204, %p205
      %p207 = scmp.ne.s32.totalorder %s199, %s201
      %p208 = scmp.eq.s32.totalorder %s32, 7
      %p209 = por %p207, %p208
      %p210 = scmp.ne.s32.totalorder %s201, %s202
      %p211 = scmp.eq.s32.totalorder %s32, 0
      %p212 = por %p210, %p211
      %p213 = scmp.ne.s32.totalorder %s201, %s202
      %p214 = scmp.eq.s32.totalorder %s33, 7
      %p215 = por %p213, %p214
      %p217 = scmp.ne.s32.totalorder %s202, %s216
      %p218 = scmp.eq.s32.totalorder %s33, 0
      %p219 = por %p217, %p218
      %s221 = sadd.s32 %s220, 1
      %p224 = scmp.eq.s32.totalorder %s27, 7
      %p225 = scmp.ne.s32.totalorder %s220, %s222
      %p226 = scmp.eq.s32.totalorder %s27, 0
      %p227 = por %p225, %p226
      %p228 = scmp.ne.s32.totalorder %s220, %s222
      %p229 = scmp.eq.s32.totalorder %s32, 7
      %p230 = por %p228, %p229
      %p231 = scmp.ne.s32.totalorder %s222, %s223
      %p232 = scmp.eq.s32.totalorder %s32, 0
      %p233 = por %p231, %p232
      %p234 = scmp.ne.s32.totalorder %s222, %s223
      %p235 = scmp.eq.s32.totalorder %s33, 7
      %p236 = por %p234, %p235
      %p238 = scmp.ne.s32.totalorder %s223, %s237
      %p239 = scmp.eq.s32.totalorder %s33, 0
      %p240 = por %p238, %p239
      %s242 = sadd.s32 %s241, 1
      %p245 = scmp.eq.s32.totalorder %s27, 7
      %p246 = scmp.ne.s32.totalorder %s241, %s243
      %p247 = scmp.eq.s32.totalorder %s27, 0
      %p248 = por %p246, %p247
      %p249 = scmp.ne.s32.totalorder %s241, %s243
      %p250 = scmp.eq.s32.totalorder %s32, 7
      %p251 = por %p249, %p250
      %p252 = scmp.ne.s32.totalorder %s243, %s244
      %p253 = scmp.eq.s32.totalorder %s32, 0
      %p254 = por %p252, %p253
      %p255 = scmp.ne.s32.totalorder %s243, %s244
      %p256 = scmp.eq.s32.totalorder %s33, 7
      %p257 = por %p255, %p256
      %p259 = scmp.ne.s32.totalorder %s244, %s258
      %p260 = scmp.eq.s32.totalorder %s33, 0
      %p261 = por %p259, %p260
      %s262 = ssub.s32 1, %s34
      %s263 = smul.u32 %s35, %s262
      %s264 = smul.u32 %s34, 3
      %s265 = sadd.s32 %s263, %s264
      %s266 = ssub.s32 1, %s46
      %s267 = smul.u32 %s42, %s266
      %s268 = smul.u32 %s46, 3
      %s269 = sadd.s32 %s267, %s268
      %s270 = ssub.s32 %s265, %s269
      %p271 = scmp.eq.s32.totalorder %s270, 0
      %s273 = sadd.s32 %s272, 1
      %s274 = scalar_select %p271, %s272, %s273
      %p277 = pneg %p271
      %p278 = scmp.eq.s32.totalorder %s27, 7
      %p279 = por %p277, %p278
      %p280 = scmp.ne.s32.totalorder %s272, %s275
      %p281 = scmp.eq.s32.totalorder %s27, 0
      %p282 = por %p280, %p281
      %p283 = scmp.ne.s32.totalorder %s272, %s275
      %p284 = scmp.eq.s32.totalorder %s32, 7
      %p285 = por %p283, %p284
      %p286 = scmp.ne.s32.totalorder %s275, %s276
      %p287 = scmp.eq.s32.totalorder %s32, 0
      %p288 = por %p286, %p287
      %p289 = scmp.ne.s32.totalorder %s275, %s276
      %p290 = scmp.eq.s32.totalorder %s33, 7
      %p291 = por %p289, %p290
      %p293 = scmp.ne.s32.totalorder %s276, %s292
      %p294 = scmp.eq.s32.totalorder %s33, 0
      %p295 = por %p293, %p294
      %s296 = smul.u32 %s35, %s34
      %s297 = smul.u32 %s42, %s46
      %s298 = ssub.s32 %s296, %s297
      %p299 = scmp.eq.s32.totalorder %s298, 0
      %s301 = sadd.s32 %s300, 1
      %s302 = scalar_select %p299, %s300, %s301
      %p305 = pneg %p299
      %p306 = scmp.eq.s32.totalorder %s27, 7
      %p307 = por %p305, %p306
      %p308 = scmp.ne.s32.totalorder %s300, %s303
      %p309 = scmp.eq.s32.totalorder %s27, 0
      %p310 = por %p308, %p309
      %p311 = scmp.ne.s32.totalorder %s300, %s303
      %p312 = scmp.eq.s32.totalorder %s32, 7
      %p313 = por %p311, %p312
      %p314 = scmp.ne.s32.totalorder %s303, %s304
      %p315 = scmp.eq.s32.totalorder %s32, 0
      %p316 = por %p314, %p315
      %p317 = scmp.ne.s32.totalorder %s303, %s304
      %p318 = scmp.eq.s32.totalorder %s33, 7
      %p319 = por %p317, %p318
      %p321 = scmp.ne.s32.totalorder %s304, %s320
      %p322 = scmp.eq.s32.totalorder %s33, 0
      %p323 = por %p321, %p322
      %s325 = sadd.s32 %s324, 1
      %p328 = scmp.eq.s32.totalorder %s27, 7
      %p329 = scmp.ne.s32.totalorder %s324, %s326
      %p330 = scmp.eq.s32.totalorder %s27, 0
      %p331 = por %p329, %p330
      %p332 = scmp.ne.s32.totalorder %s324, %s326
      %p333 = scmp.eq.s32.totalorder %s32, 7
      %p334 = por %p332, %p333
      %p335 = scmp.ne.s32.totalorder %s326, %s327
      %p336 = scmp.eq.s32.totalorder %s32, 0
      %p337 = por %p335, %p336
      %p338 = scmp.ne.s32.totalorder %s326, %s327
      %p339 = scmp.eq.s32.totalorder %s33, 7
      %p340 = por %p338, %p339
      %p342 = scmp.ne.s32.totalorder %s327, %s341
      %p343 = scmp.eq.s32.totalorder %s33, 0
      %p344 = por %p342, %p343
      %p345 = scmp.le.s32.totalorder 1, %s27
      %p346 = scmp.lt.s32.totalorder %s27, 9
      %p347 = pnand %p345, %p346
      %p348 = pneg %p347
      // Predicated region
      $region9: #{tpu_custom_call.1} parent=5 // pred_check
        _
      $region10: #{tpu_custom_call.1} parent=5 // pred_check_branch
        %350 = sbr.rel (%p347) target = $region12
      $region11: #{tpu_custom_call.1} parent=5 // pred_region
        %s351 = ssub.s32 %s27, 1
        // Predicated region
        $region13: #{tpu_custom_call.1} parent=11 // pred_check
          %p352 = pneg %p94
        $region14: #{tpu_custom_call.1} parent=11 // pred_check_branch
          %354 = sbr.rel (%p352) target = $region16
        $region15: #{tpu_custom_call.1} parent=11 // pred_region
          %s356 = ssub.s32 128, 128
          %357 = vsyncadd [#allocation11], %s356
          %s359 = sshll.u32 [#allocation10], 4
          %s360 = int_to_ptr.vmem [resolvable:$true] %s359
          %362 = dma.hbm_to_vmem [thread:$0]  %s1, 128, %s360, [#allocation11]
        $region16: #{tpu_custom_call.1} parent=11 // pred_fallthru
          _
        // Predicated region
        $region17: #{tpu_custom_call.1} parent=11 // pred_check
          %p363 = pneg %p149
        $region18: #{tpu_custom_call.1} parent=11 // pred_check_branch
          %365 = sbr.rel (%p363) target = $region20
        $region19: #{tpu_custom_call.1} parent=11 // pred_region
          _
        $region20: #{tpu_custom_call.1} parent=11 // pred_fallthru
          _
        // Predicated region
        $region21: #{tpu_custom_call.1} parent=11 // pred_check
          %p366 = pneg %p170
        $region22: #{tpu_custom_call.1} parent=11 // pred_check_branch
          %368 = sbr.rel (%p366) target = $region24
        $region23: #{tpu_custom_call.1} parent=11 // pred_region
          _
        $region24: #{tpu_custom_call.1} parent=11 // pred_fallthru
          _
        // Predicated region
        $region25: #{tpu_custom_call.1} parent=11 // pred_check
          %p369 = pneg %p191
        $region26: #{tpu_custom_call.1} parent=11 // pred_check_branch
          %371 = sbr.rel (%p369) target = $region28
        $region27: #{tpu_custom_call.1} parent=11 // pred_region
          _
        $region28: #{tpu_custom_call.1} parent=11 // pred_fallthru
          _
        // Predicated region
        $region29: #{tpu_custom_call.1} parent=11 // pred_check
          %p372 = pneg %p212
        $region30: #{tpu_custom_call.1} parent=11 // pred_check_branch
          %374 = sbr.rel (%p372) target = $region32
        $region31: #{tpu_custom_call.1} parent=11 // pred_region
          %s376 = ssub.s32 512, 512
          %377 = vsyncadd [#allocation11], %s376
          %s378 = sshll.u32 [#allocation13], 4
          %s379 = int_to_ptr.vmem [resolvable:$true] %s378
          %384 = dma.hbm_to_vmem [thread:$0]  %s6, 512, %s379, [#allocation11], 128, 128, 8
        $region32: #{tpu_custom_call.1} parent=11 // pred_fallthru
          _
        // Predicated region
        $region33: #{tpu_custom_call.1} parent=11 // pred_check
          %p385 = pneg %p233
        $region34: #{tpu_custom_call.1} parent=11 // pred_check_branch
          %387 = sbr.rel (%p385) target = $region36
        $region35: #{tpu_custom_call.1} parent=11 // pred_region
          _
        $region36: #{tpu_custom_call.1} parent=11 // pred_fallthru
          _
        // Predicated region
        $region37: #{tpu_custom_call.1} parent=11 // pred_check
          %p388 = pneg %p254
        $region38: #{tpu_custom_call.1} parent=11 // pred_check_branch
          %390 = sbr.rel (%p388) target = $region40
        $region39: #{tpu_custom_call.1} parent=11 // pred_region
          %s392 = ssub.s32 256, 256
          %393 = vsyncadd [#allocation15], %s392
          %s394 = sshll.u32 [#allocation14], 4
          %s395 = int_to_ptr.vmem [resolvable:$true] %s394
          %400 = dma.hbm_to_vmem [thread:$0]  %s8, 256, %s395, [#allocation15], 128, 128, 8
        $region40: #{tpu_custom_call.1} parent=11 // pred_fallthru
          _
      $region12: #{tpu_custom_call.1} parent=5 // pred_fallthru
        _
      %p401 = scmp.lt.s32.totalorder %s27, 8
      // Predicated region
      $region41: #{tpu_custom_call.1} parent=5 // pred_check
        %p402 = pneg %p401
      $region42: #{tpu_custom_call.1} parent=5 // pred_check_branch
        %404 = sbr.rel (%p402) target = $region44
      $region43: #{tpu_custom_call.1} parent=5 // pred_region
        // Predicated region
        $region45: #{tpu_custom_call.1} parent=43 // pred_check
          %p405 = pneg %p67
        $region46: #{tpu_custom_call.1} parent=43 // pred_check_branch
          %407 = sbr.rel (%p405) target = $region48
        $region47: #{tpu_custom_call.1} parent=43 // pred_region
          %s408 = sand.u32 %s27, 1
          %s409 = scalar_lea.sflag [#allocation8], %s408
          %s410 = sand.u32 %s57, 1
          %s411 = smul.addr %s410, 8
          %s412 = scalar_lea.vmem [#allocation7], %s411
          %s413 = ssub.s32 1, %s34
          %s414 = smul.u32 %s35, %s413
          %s415 = smul.u32 %s34, 3
          %s416 = sadd.s32 %s414, %s415
          %s418 = ssub.s32 128, 128
          %419 = vsyncadd %s409, %s418
          %s420 = smul.addr %s416, 128
          %s421 = scalar_lea.hbm %s0, %s420
          %s423 = sshll.u32 %s412, 4
          %s424 = int_to_ptr.vmem [resolvable:$true] %s423
          %426 = dma.hbm_to_vmem [thread:$0]  %s421, 128, %s424, %s409
        $region48: #{tpu_custom_call.1} parent=43 // pred_fallthru
          _
        // Predicated region
        $region49: #{tpu_custom_call.1} parent=43 // pred_check
          %p427 = pneg %p122
        $region50: #{tpu_custom_call.1} parent=43 // pred_check_branch
          %429 = sbr.rel (%p427) target = $region52
        $region51: #{tpu_custom_call.1} parent=43 // pred_region
          %s430 = sand.u32 %s27, 1
          %s431 = scalar_lea.sflag [#allocation8], %s430
          %s432 = sand.u32 %s112, 1
          %s433 = smul.addr %s432, 128
          %s434 = scalar_lea.vmem [#allocation12], %s433
          %s435 = ssub.s32 1, %s34
          %s436 = smul.u32 %s35, %s435
          %s437 = smul.u32 %s34, 3
          %s438 = sadd.s32 %s436, %s437
          %s440 = ssub.s32 2048, 2048
          %441 = vsyncadd %s431, %s440
          %s442 = smul.addr %s438, 128
          %s443 = scalar_lea.hbm %s2, %s442
          %s444 = sshll.u32 %s434, 4
          %s445 = int_to_ptr.vmem [resolvable:$true] %s444
          %450 = dma.hbm_to_vmem [thread:$0]  %s443, 2048, %s445, %s431, 512, 128, 8
        $region52: #{tpu_custom_call.1} parent=43 // pred_fallthru
          _
        // Predicated region
        $region53: #{tpu_custom_call.1} parent=43 // pred_check
          %p451 = pneg %p282
        $region54: #{tpu_custom_call.1} parent=43 // pred_check_branch
          %453 = sbr.rel (%p451) target = $region56
        $region55: #{tpu_custom_call.1} parent=43 // pred_region
          %s454 = sand.u32 %s27, 1
          %s455 = scalar_lea.sflag [#allocation8], %s454
          %s456 = sand.u32 %s272, 1
          %s457 = smul.addr %s456, 128
          %s458 = scalar_lea.vmem [#allocation16], %s457
          %s459 = ssub.s32 1, %s34
          %s460 = smul.u32 %s35, %s459
          %s461 = smul.u32 %s34, 3
          %s462 = sadd.s32 %s460, %s461
          %s463 = smul.u32 16, %s462
          %s465 = ssub.s32 2048, 2048
          %466 = vsyncadd %s455, %s465
          %s467 = smul.addr %s463, 128
          %s468 = scalar_lea.hbm %s9, %s467
          %s469 = sshll.u32 %s458, 4
          %s470 = int_to_ptr.vmem [resolvable:$true] %s469
          %475 = dma.hbm_to_vmem [thread:$0]  %s468, 2048, %s470, %s455, 128, 128, 8
        $region56: #{tpu_custom_call.1} parent=43 // pred_fallthru
          _
      $region44: #{tpu_custom_call.1} parent=5 // pred_fallthru
        _
      %p476 = scmp.le.s32.totalorder 1, %s27
      %p477 = scmp.lt.s32.totalorder %s27, 9
      %p478 = pnand %p476, %p477
      %p479 = pneg %p478
      // Predicated region
      $region57: #{tpu_custom_call.1} parent=5 // pred_check
        _
      $region58: #{tpu_custom_call.1} parent=5 // pred_check_branch
        %481 = sbr.rel (%p478) target = $region60
      $region59: #{tpu_custom_call.1} parent=5 // pred_region
        %s482 = ssub.s32 %s27, 1
        %s483 = sand.u32 %s32, 1
        %s484 = scalar_lea.sflag [#allocation8], %s483
        %s485 = sand.u32 %s60, 1
        %s486 = smul.addr %s485, 8
        %s487 = scalar_lea.vmem [#allocation7], %s486
        // Predicated region
        $region61: #{tpu_custom_call.1} parent=59 // pred_check
          %p488 = pneg %p73
        $region62: #{tpu_custom_call.1} parent=59 // pred_check_branch
          %490 = sbr.rel (%p488) target = $region64
        $region63: #{tpu_custom_call.1} parent=59 // pred_region
          %491 = dma.done %s484, 128
        $region64: #{tpu_custom_call.1} parent=59 // pred_fallthru
          _
        // Predicated region
        $region65: #{tpu_custom_call.1} parent=59 // pred_check
          %p492 = pneg %p94
        $region66: #{tpu_custom_call.1} parent=59 // pred_check_branch
          %494 = sbr.rel (%p492) target = $region68
        $region67: #{tpu_custom_call.1} parent=59 // pred_region
          %495 = dma.done [#allocation11], 128
        $region68: #{tpu_custom_call.1} parent=59 // pred_fallthru
          _
        %s496 = sand.u32 %s32, 1
        %s497 = scalar_lea.sflag [#allocation8], %s496
        %s498 = sand.u32 %s115, 1
        %s499 = smul.addr %s498, 128
        %s500 = scalar_lea.vmem [#allocation12], %s499
        // Predicated region
        $region69: #{tpu_custom_call.1} parent=59 // pred_check
          %p501 = pneg %p128
        $region70: #{tpu_custom_call.1} parent=59 // pred_check_branch
          %503 = sbr.rel (%p501) target = $region72
        $region71: #{tpu_custom_call.1} parent=59 // pred_region
          %504 = dma.done %s497, 2048
        $region72: #{tpu_custom_call.1} parent=59 // pred_fallthru
          _
        // Predicated region
        $region73: #{tpu_custom_call.1} parent=59 // pred_check
          %p505 = pneg %p212
        $region74: #{tpu_custom_call.1} parent=59 // pred_check_branch
          %507 = sbr.rel (%p505) target = $region76
        $region75: #{tpu_custom_call.1} parent=59 // pred_region
          %508 = dma.done [#allocation11], 512
        $region76: #{tpu_custom_call.1} parent=59 // pred_fallthru
          _
        // Predicated region
        $region77: #{tpu_custom_call.1} parent=59 // pred_check
          %p509 = pneg %p254
        $region78: #{tpu_custom_call.1} parent=59 // pred_check_branch
          %511 = sbr.rel (%p509) target = $region80
        $region79: #{tpu_custom_call.1} parent=59 // pred_region
          %512 = dma.done [#allocation15], 256
        $region80: #{tpu_custom_call.1} parent=59 // pred_fallthru
          _
        %s513 = sand.u32 %s32, 1
        %s514 = scalar_lea.sflag [#allocation8], %s513
        %s515 = sand.u32 %s275, 1
        %s516 = smul.addr %s515, 128
        %s517 = scalar_lea.vmem [#allocation16], %s516
        // Predicated region
        $region81: #{tpu_custom_call.1} parent=59 // pred_check
          %p518 = pneg %p288
        $region82: #{tpu_custom_call.1} parent=59 // pred_check_branch
          %520 = sbr.rel (%p518) target = $region84
        $region83: #{tpu_custom_call.1} parent=59 // pred_region
          %521 = dma.done %s514, 2048
        $region84: #{tpu_custom_call.1} parent=59 // pred_fallthru
          _
        %s522 = sand.u32 %s32, 1
        %s523 = scalar_lea.sflag [#allocation8], %s522
        %s524 = sand.u32 %s60, 1
        %s525 = smul.addr %s524, 8
        %s526 = scalar_lea.vmem [#allocation7], %s525
        %p527 = pneg %p73
        %p528 = pneg %p70
        %p529 = pneg %p94
        %p530 = pneg %p91
        %s531 = sand.u32 %s32, 1
        %s532 = scalar_lea.sflag [#allocation8], %s531
        %s533 = sand.u32 %s115, 1
        %s534 = smul.addr %s533, 128
        %s535 = scalar_lea.vmem [#allocation12], %s534
        %p536 = pneg %p128
        %p537 = pneg %p125
        %p538 = pneg %p149
        %p539 = pneg %p146
        %p540 = pneg %p170
        %p541 = pneg %p167
        %p542 = pneg %p191
        %p543 = pneg %p188
        %p544 = pneg %p212
        %p545 = pneg %p209
        %p546 = pneg %p233
        %p547 = pneg %p230
        %p548 = pneg %p254
        %p549 = pneg %p251
        %s550 = sand.u32 %s32, 1
        %s551 = scalar_lea.sflag [#allocation8], %s550
        %s552 = sand.u32 %s275, 1
        %s553 = smul.addr %s552, 128
        %s554 = scalar_lea.vmem [#allocation16], %s553
        %p555 = pneg %p288
        %p556 = pneg %p285
        %p557 = pneg %p316
        %p558 = pneg %p313
        %s559 = sand.u32 %s303, 1
        %s560 = scalar_lea.sflag [#allocation9], %s559
        %s561 = sand.u32 %s303, 1
        %s562 = smul.addr %s561, 8
        %s563 = scalar_lea.vmem [#allocation17], %s562
        %p564 = pneg %p337
        %p565 = pneg %p334
        %s566 = ssub.s32 1, %s36
        %s567 = smul.u32 %s37, %s566
        %s568 = smul.u32 %s36, 3
        %s569 = sadd.s32 %s567, %s568
        %s570 = ssub.s32 1, %s36
        %s571 = smul.u32 %s37, %s570
        %s572 = smul.u32 %s36, 3
        %s573 = sadd.s32 %s571, %s572
        %s574 = ssub.s32 1, %s36
        %s575 = smul.u32 %s37, %s574
        %s576 = smul.u32 %s36, 3
        %s577 = sadd.s32 %s575, %s576
        %s578 = smul.u32 16, %s577
        %s579 = smul.u32 %s37, %s36
        %p580 = scmp.eq.s32.totalorder %s36, 0
        // Predicated region
        $region85: #{tpu_custom_call.1} parent=59 // pred_check
          %p581 = pneg %p580
        $region86: #{tpu_custom_call.1} parent=59 // pred_check_branch
          %583 = sbr.rel (%p581) target = $region88
        $region87: #{tpu_custom_call.1} parent=59 // pred_region
          %p584 = scmp.eq.s32.totalorder %s37, 0
          // Predicated region
          $region89: #{tpu_custom_call.1} parent=87 // pred_check
            %p585 = pneg %p584
          $region90: #{tpu_custom_call.1} parent=87 // pred_check_branch
            %587 = sbr.rel (%p585) target = $region92
          $region91: #{tpu_custom_call.1} parent=87 // pred_region
            %588 = vst [vmem:[#allocation2] sm:$0xff] 0.0
            %vm589 = vcmask 7168
            %590 = vst.msk [vmem:[#allocation3] sm:$0xff] %vm589, -inf
            %591 = vst.msk [vmem:[#allocation3 + $0x8] sm:$0xff] %vm589, -inf
            %592 = vst.msk [vmem:[#allocation4] sm:$0xff] %vm589, 0.0
            %593 = vst.msk [vmem:[#allocation4 + $0x8] sm:$0xff] %vm589, 0.0
          $region92: #{tpu_custom_call.1} parent=87 // pred_fallthru
            _
          %v594 = vld [vmem:[#allocation2] sm:$0xff]
          %v595 = vld [vmem:[%s487] sm:$0xff]
          %v596 = vld [vmem:[%s500] sm:$0xff]
          %v597 = vld [vmem:[%s500 + $0x8] sm:$0xff]
          %v598 = vld [vmem:[%s500 + $0x10] sm:$0xff]
          %v599 = vld [vmem:[%s500 + $0x18] sm:$0xff]
          %v600 = vld [vmem:[%s500 + $0x20] sm:$0xff]
          %v601 = vld [vmem:[%s500 + $0x28] sm:$0xff]
          %v602 = vld [vmem:[%s500 + $0x30] sm:$0xff]
          %v603 = vld [vmem:[%s500 + $0x38] sm:$0xff]
          %v604 = vld [vmem:[%s500 + $0x40] sm:$0xff]
          %v605 = vld [vmem:[%s500 + $0x48] sm:$0xff]
          %v606 = vld [vmem:[%s500 + $0x50] sm:$0xff]
          %v607 = vld [vmem:[%s500 + $0x58] sm:$0xff]
          %v608 = vld [vmem:[%s500 + $0x60] sm:$0xff]
          %v609 = vld [vmem:[%s500 + $0x68] sm:$0xff]
          %v610 = vld [vmem:[%s500 + $0x70] sm:$0xff]
          %v611 = vld [vmem:[%s500 + $0x78] sm:$0xff]
          %612 = vmatprep.subr.mxu0 0.0
          %613 = vmatpush1.xpose.msra.mxu0 %v611
          %614 = vmatprep.subr.mxu0 0.0
          %615 = vmatpush1.xpose.msra.mxu0 %v610
          %616 = vmatprep.subr.mxu0 0.0
          %617 = vmatpush1.xpose.msra.mxu0 %v609
          %618 = vmatprep.subr.mxu0 0.0
          %619 = vmatpush1.xpose.msra.mxu0 %v608
          %620 = vmatprep.subr.mxu0 0.0
          %621 = vmatpush1.xpose.msra.mxu0 %v607
          %622 = vmatprep.subr.mxu0 0.0
          %623 = vmatpush1.xpose.msra.mxu0 %v606
          %624 = vmatprep.subr.mxu0 0.0
          %625 = vmatpush1.xpose.msra.mxu0 %v605
          %626 = vmatprep.subr.mxu0 0.0
          %627 = vmatpush1.xpose.msra.mxu0 %v604
          %628 = vmatprep.subr.mxu0 0.0
          %629 = vmatpush1.xpose.msra.mxu0 %v603
          %630 = vmatprep.subr.mxu0 0.0
          %631 = vmatpush1.xpose.msra.mxu0 %v602
          %632 = vmatprep.subr.mxu0 0.0
          %633 = vmatpush1.xpose.msra.mxu0 %v601
          %634 = vmatprep.subr.mxu0 0.0
          %635 = vmatpush1.xpose.msra.mxu0 %v600
          %636 = vmatprep.subr.mxu0 0.0
          %637 = vmatpush1.xpose.msra.mxu0 %v599
          %638 = vmatprep.subr.mxu0 0.0
          %639 = vmatpush1.xpose.msra.mxu0 %v598
          %640 = vmatprep.subr.mxu0 0.0
          %641 = vmatpush1.xpose.msra.mxu0 %v597
          %642 = vmatprep.subr.mxu0 0.0
          %643 = vmatpush1.xpose.msra.mxu0 %v596
          %644 = vmatprep.subr.mxu0 0.0
          %645 = vmatpush2.xpose.msra.mxu0 0.0
          %646 = vmatprep.subr.mxu0 0.0
          %647 = vmatpush2.xpose.msra.mxu0 0.0
          %648 = vmatprep.subr.mxu0 0.0
          %649 = vmatpush2.xpose.msra.mxu0 0.0
          %650 = vmatprep.subr.mxu0 0.0
          %651 = vmatpush2.xpose.msra.mxu0 0.0
          %652 = vmatprep.subr.mxu0 0.0
          %653 = vmatpush2.xpose.msra.mxu0 0.0
          %654 = vmatprep.subr.mxu0 0.0
          %655 = vmatpush2.xpose.msra.mxu0 0.0
          %656 = vmatprep.subr.mxu0 0.0
          %657 = vmatpush2.xpose.msra.mxu0 0.0
          %658 = vmatprep.subr.mxu0 0.0
          %659 = vmatpush2.xpose.msra.mxu0 0.0
          %660 = vmatprep.subr.mxu0 0.0
          %661 = vmatpush2.xpose.msra.mxu0 0.0
          %662 = vmatprep.subr.mxu0 0.0
          %663 = vmatpush2.xpose.msra.mxu0 0.0
          %664 = vmatprep.subr.mxu0 0.0
          %665 = vmatpush2.xpose.msra.mxu0 0.0
          %666 = vmatprep.subr.mxu0 0.0
          %667 = vmatpush2.xpose.msra.mxu0 0.0
          %668 = vmatprep.subr.mxu0 0.0
          %669 = vmatpush2.xpose.msra.mxu0 0.0
          %670 = vmatprep.subr.mxu0 0.0
          %671 = vmatpush2.xpose.msra.mxu0 0.0
          %672 = vmatprep.subr.mxu0 0.0
          %673 = vmatpush2.xpose.msra.mxu0 0.0
          %674 = vmatprep.subr.mxu0 0.0
          %675 = vmatpush2.xpose.msra.mxu0 0.0
          %676 = vmatprep.mubr.f32.mxu0 0.0
          %677 = vmatmul.mubr.f32.gmra.mxu0 %v595
          %v678 = vpop.f32.mrf.mxu0
          %v679 = vadd.f32 0.0, %v678
          %v680 = vpop.f32.mrf.mxu0
          %681 = vdwg.mxu0
          %v682 = vadd.f32 %v594, %v679
          %683 = vst [vmem:[#allocation2] sm:$0xff] %v682
          %v684 = vld [vmem:[#allocation14] sm:$0xff]
          %v685 = vld [vmem:[#allocation14 + $0x8] sm:$0xff]
          %v686 = vld [vmem:[%s517] sm:$0xff]
          %v687 = vld [vmem:[%s517 + $0x8] sm:$0xff]
          %v688 = vld [vmem:[%s517 + $0x10] sm:$0xff]
          %v689 = vld [vmem:[%s517 + $0x18] sm:$0xff]
          %v690 = vld [vmem:[%s517 + $0x20] sm:$0xff]
          %v691 = vld [vmem:[%s517 + $0x28] sm:$0xff]
          %v692 = vld [vmem:[%s517 + $0x30] sm:$0xff]
          %v693 = vld [vmem:[%s517 + $0x38] sm:$0xff]
          %v694 = vld [vmem:[%s517 + $0x40] sm:$0xff]
          %v695 = vld [vmem:[%s517 + $0x48] sm:$0xff]
          %v696 = vld [vmem:[%s517 + $0x50] sm:$0xff]
          %v697 = vld [vmem:[%s517 + $0x58] sm:$0xff]
          %v698 = vld [vmem:[%s517 + $0x60] sm:$0xff]
          %v699 = vld [vmem:[%s517 + $0x68] sm:$0xff]
          %v700 = vld [vmem:[%s517 + $0x70] sm:$0xff]
          %v701 = vld [vmem:[%s517 + $0x78] sm:$0xff]
          %702 = vmatprep.subr.mxu0 0.0
          %703 = vmatpush1.xpose.msra.mxu0 %v701
          %704 = vmatprep.subr.mxu0 0.0
          %705 = vmatpush1.xpose.msra.mxu0 %v700
          %706 = vmatprep.subr.mxu0 0.0
          %707 = vmatpush1.xpose.msra.mxu0 %v699
          %708 = vmatprep.subr.mxu0 0.0
          %709 = vmatpush1.xpose.msra.mxu0 %v698
          %710 = vmatprep.subr.mxu0 0.0
          %711 = vmatpush1.xpose.msra.mxu0 %v697
          %712 = vmatprep.subr.mxu0 0.0
          %713 = vmatpush1.xpose.msra.mxu0 %v696
          %714 = vmatprep.subr.mxu0 0.0
          %715 = vmatpush1.xpose.msra.mxu0 %v695
          %716 = vmatprep.subr.mxu0 0.0
          %717 = vmatpush1.xpose.msra.mxu0 %v694
          %718 = vmatprep.subr.mxu0 0.0
          %719 = vmatpush1.xpose.msra.mxu0 %v693
          %720 = vmatprep.subr.mxu0 0.0
          %721 = vmatpush1.xpose.msra.mxu0 %v692
          %722 = vmatprep.subr.mxu0 0.0
          %723 = vmatpush1.xpose.msra.mxu0 %v691
          %724 = vmatprep.subr.mxu0 0.0
          %725 = vmatpush1.xpose.msra.mxu0 %v690
          %726 = vmatprep.subr.mxu0 0.0
          %727 = vmatpush1.xpose.msra.mxu0 %v689
          %728 = vmatprep.subr.mxu0 0.0
          %729 = vmatpush1.xpose.msra.mxu0 %v688
          %730 = vmatprep.subr.mxu0 0.0
          %731 = vmatpush1.xpose.msra.mxu0 %v687
          %732 = vmatprep.subr.mxu0 0.0
          %733 = vmatpush1.xpose.msra.mxu0 %v686
          %734 = vmatprep.subr.mxu0 0.0
          %735 = vmatpush2.xpose.msra.mxu0 0.0
          %736 = vmatprep.subr.mxu0 0.0
          %737 = vmatpush2.xpose.msra.mxu0 0.0
          %738 = vmatprep.subr.mxu0 0.0
          %739 = vmatpush2.xpose.msra.mxu0 0.0
          %740 = vmatprep.subr.mxu0 0.0
          %741 = vmatpush2.xpose.msra.mxu0 0.0
          %742 = vmatprep.subr.mxu0 0.0
          %743 = vmatpush2.xpose.msra.mxu0 0.0
          %744 = vmatprep.subr.mxu0 0.0
          %745 = vmatpush2.xpose.msra.mxu0 0.0
          %746 = vmatprep.subr.mxu0 0.0
          %747 = vmatpush2.xpose.msra.mxu0 0.0
          %748 = vmatprep.subr.mxu0 0.0
          %749 = vmatpush2.xpose.msra.mxu0 0.0
          %750 = vmatprep.subr.mxu0 0.0
          %751 = vmatpush2.xpose.msra.mxu0 0.0
          %752 = vmatprep.subr.mxu0 0.0
          %753 = vmatpush2.xpose.msra.mxu0 0.0
          %754 = vmatprep.subr.mxu0 0.0
          %755 = vmatpush2.xpose.msra.mxu0 0.0
          %756 = vmatprep.subr.mxu0 0.0
          %757 = vmatpush2.xpose.msra.mxu0 0.0
          %758 = vmatprep.subr.mxu0 0.0
          %759 = vmatpush2.xpose.msra.mxu0 0.0
          %760 = vmatprep.subr.mxu0 0.0
          %761 = vmatpush2.xpose.msra.mxu0 0.0
          %762 = vmatprep.subr.mxu0 0.0
          %763 = vmatpush2.xpose.msra.mxu0 0.0
          %764 = vmatprep.subr.mxu0 0.0
          %765 = vmatpush2.xpose.msra.mxu0 0.0
          %766 = vmatprep.mubr.f32.mxu0 0.0
          %767 = vmatmul.mubr.f32.gmra.mxu0 %v684
          %v768 = vpop.f32.mrf.mxu0
          %v769 = vadd.f32 0.0, %v768
          %v770 = vpop.f32.mrf.mxu0
          %771 = vmatprep.mubr.f32.mxu0 0.0
          %772 = vmatmul.mubr.f32.gmra.mxu0 %v685
          %v773 = vpop.f32.mrf.mxu0
          %v774 = vadd.f32 0.0, %v773
          %v775 = vpop.f32.mrf.mxu0
          %776 = vdwg.mxu0
          %s777 = smul.u32 %s37, 16
          %s778 = scalar_lea.vmem [#allocation6], %s777
          %779 = vst [vmem:[%s778] sm:$0xff] %v769
          %780 = vst [vmem:[%s778 + $0x8] sm:$0xff] %v774
          %781 = vmax.xlane.f32.xlu0 %v769
          %v782 = vpop.xlane.xlu0 %781
          %783 = vmax.xlane.f32.xlu0 %v774
          %v784 = vpop.xlane.xlu0 %783
          %v785 = vld [vmem:[#allocation3] sm:$0xff]
          %v786 = vld [vmem:[#allocation3 + $0x8] sm:$0xff]
          %v787 = vmax.f32 %v785, %v782
          %v788 = vmax.f32 %v786, %v784
          %v789 = vld [vmem:[#allocation4] sm:$0xff]
          %v790 = vld [vmem:[#allocation4 + $0x8] sm:$0xff]
          %v791 = vsub.f32 %v785, %v787
          %v792 = vsub.f32 %v786, %v788
          %v793 = vmul.f32 %v791, 1.442695
          %v794 = vpow.pop %v793
          %v795 = vmul.f32 %v792, 1.442695
          %v796 = vpow.pop %v795
          %v797 = vmul.f32 %v789, %v794
          %v798 = vmul.f32 %v790, %v796
          %800 = vset.pattern.permute.xlu0 0
          %801 = vperm.xlu0 %800, %v787
          %v802 = vpop.permute.xlu0 %801
          %805 = vset.pattern.permute.xlu0 0
          %806 = vperm.xlu0 %805, %v788
          %v807 = vpop.permute.xlu0 %806
          %v809 = vsub.f32 %v769, %v802
          %v810 = vsub.f32 %v774, %v807
          %v811 = vmul.f32 %v809, 1.442695
          %v812 = vpow.pop %v811
          %v813 = vmul.f32 %v810, 1.442695
          %v814 = vpow.pop %v813
          %815 = vadd.xlane.f32.xlu0 %v812
          %v816 = vpop.xlane.xlu0 %815
          %817 = vadd.xlane.f32.xlu0 %v814
          %v818 = vpop.xlane.xlu0 %817
          %v819 = vadd.f32 %v797, %v816
          %v820 = vadd.f32 %v798, %v818
          %vm821 = vcmask 7168
          %822 = vst.msk [vmem:[#allocation4] sm:$0xff] %vm821, %v819
          %823 = vst.msk [vmem:[#allocation4 + $0x8] sm:$0xff] %vm821, %v820
          %824 = vst.msk [vmem:[#allocation3] sm:$0xff] %vm821, %v787
          %825 = vst.msk [vmem:[#allocation3 + $0x8] sm:$0xff] %vm821, %v788
          %p826 = scmp.eq.s32.totalorder %s37, 3
          // Predicated region
          $region93: #{tpu_custom_call.1} parent=87 // pred_check
            %p827 = pneg %p826
          $region94: #{tpu_custom_call.1} parent=87 // pred_check_branch
            %829 = sbr.rel (%p827) target = $region96
          $region95: #{tpu_custom_call.1} parent=87 // pred_region
            %v830 = vld [vmem:[#allocation2] sm:$0xff]
            %v831 = vld [vmem:[%s3] sm:$0x1]
            %v833 = vlaneseq
            %v834 = vshrl.u32 %v833, 7
            %v835 = vsub.s32 0, %v834
            %v836 = vrot.slane %v831, %v835
            %v838 = vadd.f32 %v830, %v836
            %v839 = vrot.slane %v838, 4
            %v840 = vadd.f32 %v838, %v839
            %v841 = vrot.slane %v840, 2
            %v842 = vadd.f32 %v840, %v841
            %v843 = vrot.slane %v842, 1
            %v844 = vadd.f32 %v842, %v843
            %v845 = vrcp.pop 8.0
            %v846 = vmul.f32 %v844, %v845
            %v847 = vsub.f32 %v838, %v846
            %v848 = vmul.f32 %v847, %v847
            %v849 = vrot.slane %v848, 4
            %v850 = vadd.f32 %v848, %v849
            %v851 = vrot.slane %v850, 2
            %v852 = vadd.f32 %v850, %v851
            %v853 = vrot.slane %v852, 1
            %v854 = vadd.f32 %v852, %v853
            %v855 = vmul.f32 %v854, %v845
            %v856 = vadd.f32 %v855, 1e-05
            %v857 = vrsqrt.pop %v856
            %v858 = vmul.f32 %v847, %v857
            %v859 = vld [vmem:[%s4] sm:$0x1]
            %v861 = vlaneseq
            %v862 = vshrl.u32 %v861, 7
            %v863 = vsub.s32 0, %v862
            %v864 = vrot.slane %v859, %v863
            %v866 = vmul.f32 %v858, %v864
            %v867 = vld [vmem:[%s5] sm:$0x1]
            %v869 = vlaneseq
            %v870 = vshrl.u32 %v869, 7
            %v871 = vsub.s32 0, %v870
            %v872 = vrot.slane %v867, %v871
            %v874 = vadd.f32 %v866, %v872
            %v875 = vmax.f32 %v874, 0.0
            %v876 = vld [vmem:[#allocation13] sm:$0xff]
            %v877 = vld [vmem:[#allocation13 + $0x8] sm:$0xff]
            %v878 = vld [vmem:[#allocation13 + $0x10] sm:$0xff]
            %v879 = vld [vmem:[#allocation13 + $0x18] sm:$0xff]
            %v880 = vld [vmem:[%s7] sm:$0x1]
            %v882 = vlaneseq
            %v883 = vshrl.u32 %v882, 7
            %v884 = vsub.s32 0, %v883
            %v885 = vrot.slane %v880, %v884
            %887 = vmatprep.subr.mxu0 0.0
            %888 = vmatpush1.xpose.msra.mxu0 0.0
            %889 = vmatprep.subr.mxu0 0.0
            %890 = vmatpush1.xpose.msra.mxu0 0.0
            %891 = vmatprep.subr.mxu0 0.0
            %892 = vmatpush1.xpose.msra.mxu0 0.0
            %893 = vmatprep.subr.mxu0 0.0
            %894 = vmatpush1.xpose.msra.mxu0 0.0
            %895 = vmatprep.subr.mxu0 0.0
            %896 = vmatpush1.xpose.msra.mxu0 0.0
            %897 = vmatprep.subr.mxu0 0.0
            %898 = vmatpush1.xpose.msra.mxu0 0.0
            %899 = vmatprep.subr.mxu0 0.0
            %900 = vmatpush1.xpose.msra.mxu0 0.0
            %901 = vmatprep.subr.mxu0 0.0
            %902 = vmatpush1.xpose.msra.mxu0 0.0
            %903 = vmatprep.subr.mxu0 0.0
            %904 = vmatpush1.xpose.msra.mxu0 0.0
            %905 = vmatprep.subr.mxu0 0.0
            %906 = vmatpush1.xpose.msra.mxu0 0.0
            %907 = vmatprep.subr.mxu0 0.0
            %908 = vmatpush1.xpose.msra.mxu0 0.0
            %909 = vmatprep.subr.mxu0 0.0
            %910 = vmatpush1.xpose.msra.mxu0 0.0
            %911 = vmatprep.subr.mxu0 0.0
            %912 = vmatpush1.xpose.msra.mxu0 %v879
            %913 = vmatprep.subr.mxu0 0.0
            %914 = vmatpush1.xpose.msra.mxu0 %v878
            %915 = vmatprep.subr.mxu0 0.0
            %916 = vmatpush1.xpose.msra.mxu0 %v877
            %917 = vmatprep.subr.mxu0 0.0
            %918 = vmatpush1.xpose.msra.mxu0 %v876
            %919 = vmatprep.subr.mxu0 0.0
            %920 = vmatpush2.xpose.msra.mxu0 0.0
            %921 = vmatprep.subr.mxu0 0.0
            %922 = vmatpush2.xpose.msra.mxu0 0.0
            %923 = vmatprep.subr.mxu0 0.0
            %924 = vmatpush2.xpose.msra.mxu0 0.0
            %925 = vmatprep.subr.mxu0 0.0
            %926 = vmatpush2.xpose.msra.mxu0 0.0
            %927 = vmatprep.subr.mxu0 0.0
            %928 = vmatpush2.xpose.msra.mxu0 0.0
            %929 = vmatprep.subr.mxu0 0.0
            %930 = vmatpush2.xpose.msra.mxu0 0.0
            %931 = vmatprep.subr.mxu0 0.0
            %932 = vmatpush2.xpose.msra.mxu0 0.0
            %933 = vmatprep.subr.mxu0 0.0
            %934 = vmatpush2.xpose.msra.mxu0 0.0
            %935 = vmatprep.subr.mxu0 0.0
            %936 = vmatpush2.xpose.msra.mxu0 0.0
            %937 = vmatprep.subr.mxu0 0.0
            %938 = vmatpush2.xpose.msra.mxu0 0.0
            %939 = vmatprep.subr.mxu0 0.0
            %940 = vmatpush2.xpose.msra.mxu0 0.0
            %941 = vmatprep.subr.mxu0 0.0
            %942 = vmatpush2.xpose.msra.mxu0 0.0
            %943 = vmatprep.subr.mxu0 0.0
            %944 = vmatpush2.xpose.msra.mxu0 0.0
            %945 = vmatprep.subr.mxu0 0.0
            %946 = vmatpush2.xpose.msra.mxu0 0.0
            %947 = vmatprep.subr.mxu0 0.0
            %948 = vmatpush2.xpose.msra.mxu0 0.0
            %949 = vmatprep.subr.mxu0 0.0
            %950 = vmatpush2.xpose.msra.mxu0 0.0
            %951 = vmatprep.mubr.f32.mxu0 0.0
            %952 = vmatmul.mubr.f32.gmra.mxu0 %v875
            %v953 = vpop.f32.mrf.mxu0
            %v954 = vadd.f32 %v885, %v953
            %v955 = vpop.f32.mrf.mxu0
            %956 = vdwg.mxu0
            %v957 = vmul.f32 %v954, 0.5
            %v958 = vmul.f32 %v957, 1.442695
            %v959 = vpow.pop %v958
            %v960 = vld [vmem:[#allocation10] sm:$0xff]
            %962 = vrot.lane.b32.xlu0 %v960, 16
            %v963 = vpop.permute.xlu0 %962
            %v965 = vmul.f32 %v959, %v963
            %967 = vrot.lane.b32.xlu0 %v965, 112
            %v968 = vpop.permute.xlu0 %967
            %v970 = vadd.f32 %v954, %v968
            %vm971 = vcmask 130048
            %v972 = vsel %vm971, %v970, -inf
            %973 = vmax.xlane.f32.xlu0 %v972
            %v974 = vpop.xlane.xlu0 %973
            %v975 = vsub.f32 %v970, %v974
            %v976 = vmul.f32 %v975, 1.442695
            %v977 = vpow.pop %v976
            %v978 = vsel %vm971, %v977, 0.0
            %979 = vadd.xlane.f32.xlu0 %v978
            %v980 = vpop.xlane.xlu0 %979
            %v981 = vlog2.pop %v980
            %v982 = vmul.f32 %v981, 0.6931472
            %v983 = vsub.f32 %v975, %v982
            %v984 = vmul.f32 %v983, 1.442695
            %v985 = vpow.pop %v984
            %986 = vst.msk [vmem:[#allocation5] sm:$0xff] %vm971, %v985
            %vm987 = vcmask 261120
            %988 = vst.msk [vmem:[#allocation18] sm:$0xff] %vm987, %v954
            %990 = vrot.lane.b32.xlu0 %v985, 32
            %v991 = vpop.permute.xlu0 %990
            %vm993 = vcmask 392448
            %994 = vst.msk [vmem:[#allocation18] sm:$0xff] %vm993, %v991
            %v995 = vld [vmem:[#allocation3] sm:$0xff]
            %v996 = vld [vmem:[#allocation3 + $0x8] sm:$0xff]
            %v997 = vld [vmem:[#allocation4] sm:$0xff]
            %v998 = vld [vmem:[#allocation4 + $0x8] sm:$0xff]
            %v999 = vlog2.pop %v997
            %v1000 = vmul.f32 %v999, 0.6931472
            %v1001 = vlog2.pop %v998
            %v1002 = vmul.f32 %v1001, 0.6931472
            %v1003 = vadd.f32 %v995, %v1000
            %v1004 = vadd.f32 %v996, %v1002
            %1005 = vst.msk [vmem:[#allocation3] sm:$0xff] %vm821, %v1003
            %1006 = vst.msk [vmem:[#allocation3 + $0x8] sm:$0xff] %vm821, %v1004
          $region96: #{tpu_custom_call.1} parent=87 // pred_fallthru
            _
        $region88: #{tpu_custom_call.1} parent=59 // pred_fallthru
          _
        %p1007 = scmp.eq.s32.totalorder %s36, 1
        // Predicated region
        $region97: #{tpu_custom_call.1} parent=59 // pred_check
          %p1008 = pneg %p1007
        $region98: #{tpu_custom_call.1} parent=59 // pred_check_branch
          %1010 = sbr.rel (%p1008) target = $region100
        $region99: #{tpu_custom_call.1} parent=59 // pred_region
          %s1011 = smul.u32 %s37, 16
          %s1012 = scalar_lea.vmem [#allocation6], %s1011
          %v1013 = vld [vmem:[%s1012] sm:$0xff]
          %v1014 = vld [vmem:[%s1012 + $0x8] sm:$0xff]
          %v1015 = vld [vmem:[#allocation3] sm:$0xff]
          %v1016 = vld [vmem:[#allocation3 + $0x8] sm:$0xff]
          %1018 = vset.pattern.permute.xlu0 0
          %1019 = vperm.xlu0 %1018, %v1015
          %v1020 = vpop.permute.xlu0 %1019
          %1023 = vset.pattern.permute.xlu0 0
          %1024 = vperm.xlu0 %1023, %v1016
          %v1025 = vpop.permute.xlu0 %1024
          %v1027 = vsub.f32 %v1013, %v1020
          %v1028 = vsub.f32 %v1014, %v1025
          %v1029 = vmul.f32 %v1027, 1.442695
          %v1030 = vpow.pop %v1029
          %v1031 = vmul.f32 %v1028, 1.442695
          %v1032 = vpow.pop %v1031
          %v1033 = vld [vmem:[#allocation5] sm:$0xff]
          %vm1034 = vcmask 130048
          %v1036 = vsel %vm1034, %v1033, 0
          %1038 = vmatprep.subr.mxu0 0.0
          %1039 = vmatpush1.msra.mxu0 0.0
          %1040 = vmatprep.subr.mxu0 0.0
          %1041 = vmatpush1.msra.mxu0 0.0
          %1042 = vmatprep.subr.mxu0 0.0
          %1043 = vmatpush1.msra.mxu0 0.0
          %1044 = vmatprep.subr.mxu0 0.0
          %1045 = vmatpush1.msra.mxu0 0.0
          %1046 = vmatprep.subr.mxu0 0.0
          %1047 = vmatpush1.msra.mxu0 0.0
          %1048 = vmatprep.subr.mxu0 0.0
          %1049 = vmatpush1.msra.mxu0 0.0
          %1050 = vmatprep.subr.mxu0 0.0
          %1051 = vmatpush1.msra.mxu0 0.0
          %1052 = vmatprep.subr.mxu0 0.0
          %1053 = vmatpush1.msra.mxu0 0.0
          %1054 = vmatprep.subr.mxu0 0.0
          %1055 = vmatpush1.msra.mxu0 0.0
          %1056 = vmatprep.subr.mxu0 0.0
          %1057 = vmatpush1.msra.mxu0 0.0
          %1058 = vmatprep.subr.mxu0 0.0
          %1059 = vmatpush1.msra.mxu0 0.0
          %1060 = vmatprep.subr.mxu0 0.0
          %1061 = vmatpush1.msra.mxu0 0.0
          %1062 = vmatprep.subr.mxu0 0.0
          %1063 = vmatpush1.msra.mxu0 0.0
          %1064 = vmatprep.subr.mxu0 0.0
          %1065 = vmatpush1.msra.mxu0 0.0
          %1066 = vmatprep.subr.mxu0 0.0
          %1067 = vmatpush1.msra.mxu0 %v1032
          %1068 = vmatprep.subr.mxu0 0.0
          %1069 = vmatpush1.msra.mxu0 %v1030
          %1070 = vmatprep.subr.mxu0 0.0
          %1071 = vmatpush2.msra.mxu0 0.0
          %1072 = vmatprep.subr.mxu0 0.0
          %1073 = vmatpush2.msra.mxu0 0.0
          %1074 = vmatprep.subr.mxu0 0.0
          %1075 = vmatpush2.msra.mxu0 0.0
          %1076 = vmatprep.subr.mxu0 0.0
          %1077 = vmatpush2.msra.mxu0 0.0
          %1078 = vmatprep.subr.mxu0 0.0
          %1079 = vmatpush2.msra.mxu0 0.0
          %1080 = vmatprep.subr.mxu0 0.0
          %1081 = vmatpush2.msra.mxu0 0.0
          %1082 = vmatprep.subr.mxu0 0.0
          %1083 = vmatpush2.msra.mxu0 0.0
          %1084 = vmatprep.subr.mxu0 0.0
          %1085 = vmatpush2.msra.mxu0 0.0
          %1086 = vmatprep.subr.mxu0 0.0
          %1087 = vmatpush2.msra.mxu0 0.0
          %1088 = vmatprep.subr.mxu0 0.0
          %1089 = vmatpush2.msra.mxu0 0.0
          %1090 = vmatprep.subr.mxu0 0.0
          %1091 = vmatpush2.msra.mxu0 0.0
          %1092 = vmatprep.subr.mxu0 0.0
          %1093 = vmatpush2.msra.mxu0 0.0
          %1094 = vmatprep.subr.mxu0 0.0
          %1095 = vmatpush2.msra.mxu0 0.0
          %1096 = vmatprep.subr.mxu0 0.0
          %1097 = vmatpush2.msra.mxu0 0.0
          %1098 = vmatprep.subr.mxu0 0.0
          %1099 = vmatpush2.msra.mxu0 0.0
          %1100 = vmatprep.subr.mxu0 0.0
          %1101 = vmatpush2.msra.mxu0 0.0
          %1102 = vmatprep.mubr.f32.mxu0 0.0
          %1103 = vmatmul.mubr.f32.gmra.mxu0 %v1036
          %v1104 = vpop.f32.mrf.mxu0
          %v1105 = vadd.f32 0.0, %v1104
          %v1106 = vpop.f32.mrf.mxu0
          %1107 = vdwg.mxu0
          %1108 = vst [vmem:[%s563] sm:$0xff] %v1105
        $region100: #{tpu_custom_call.1} parent=59 // pred_fallthru
          _
        %s1109 = sand.u32 %s303, 1
        %s1110 = scalar_lea.sflag [#allocation9], %s1109
        %s1111 = sand.u32 %s303, 1
        %s1112 = smul.addr %s1111, 8
        %s1113 = scalar_lea.vmem [#allocation17], %s1112
        // Predicated region
        $region101: #{tpu_custom_call.1} parent=59 // pred_check
          %p1114 = pneg %p313
        $region102: #{tpu_custom_call.1} parent=59 // pred_check_branch
          %1116 = sbr.rel (%p1114) target = $region104
        $region103: #{tpu_custom_call.1} parent=59 // pred_region
          %s1117 = smul.u32 %s37, %s36
          %s1119 = ssub.s32 128, 128
          %1120 = vsyncadd %s1110, %s1119
          %s1121 = smul.addr %s1117, 128
          %s1122 = scalar_lea.hbm %s10, %s1121
          %s1124 = sshll.u32 %s1113, 4
          %s1125 = int_to_ptr.vmem [resolvable:$true] %s1124
          %1127 = dma.vmem_to_hbm [thread:$0]  %s1125, 128, %s1122, %s1110
        $region104: #{tpu_custom_call.1} parent=59 // pred_fallthru
          _
        // Predicated region
        $region105: #{tpu_custom_call.1} parent=59 // pred_check
          %p1128 = pneg %p334
        $region106: #{tpu_custom_call.1} parent=59 // pred_check_branch
          %1130 = sbr.rel (%p1128) target = $region108
        $region107: #{tpu_custom_call.1} parent=59 // pred_region
          %s1132 = ssub.s32 128, 128
          %1133 = vsyncadd [#allocation19], %s1132
          %s1135 = sshll.u32 [#allocation18], 4
          %s1136 = int_to_ptr.vmem [resolvable:$true] %s1135
          %1138 = dma.vmem_to_hbm [thread:$0]  %s1136, 128, %s11, [#allocation19]
        $region108: #{tpu_custom_call.1} parent=59 // pred_fallthru
          _
        // Predicated region
        $region109: #{tpu_custom_call.1} parent=59 // pred_check
          %p1139 = pneg %p334
        $region110: #{tpu_custom_call.1} parent=59 // pred_check_branch
          %1141 = sbr.rel (%p1139) target = $region112
        $region111: #{tpu_custom_call.1} parent=59 // pred_region
          %1142 = dma.done [#allocation19], 128
        $region112: #{tpu_custom_call.1} parent=59 // pred_fallthru
          _
      $region60: #{tpu_custom_call.1} parent=5 // pred_fallthru
        _
      %p1143 = scmp.le.s32.totalorder 2, %s27
      // Predicated region
      $region113: #{tpu_custom_call.1} parent=5 // pred_check
        %p1144 = pneg %p1143
      $region114: #{tpu_custom_call.1} parent=5 // pred_check_branch
        %1146 = sbr.rel (%p1144) target = $region116
      $region115: #{tpu_custom_call.1} parent=5 // pred_region
        %s1147 = ssub.s32 %s27, 2
        // Predicated region
        $region117: #{tpu_custom_call.1} parent=115 // pred_check
          %p1148 = pneg %p319
        $region118: #{tpu_custom_call.1} parent=115 // pred_check_branch
          %1150 = sbr.rel (%p1148) target = $region120
        $region119: #{tpu_custom_call.1} parent=115 // pred_region
          %s1151 = sand.u32 %s304, 1
          %s1152 = scalar_lea.sflag [#allocation9], %s1151
          %s1153 = sand.u32 %s304, 1
          %s1154 = smul.addr %s1153, 8
          %s1155 = scalar_lea.vmem [#allocation17], %s1154
          %1156 = dma.done %s1152, 128
        $region120: #{tpu_custom_call.1} parent=115 // pred_fallthru
          _
      $region116: #{tpu_custom_call.1} parent=5 // pred_fallthru
        _
    $region6: #{tpu_custom_call.1} parent=1 // loop_footer
      %s31 = sadd.s32 1, %s27
    $region7: #{tpu_custom_call.1} parent=1 // loop_footer_branch
      %26 = sbr.rel target = $region3
    $region8: #{tpu_custom_call.1} parent=1 // loop_exit
      _
    %1157 = vsyncpa [#allocation8], 1
    %s1158 = scalar_lea.sflag [#allocation8], 1
    %1159 = vsyncpa %s1158, 1
    %1160 = vsyncpa [#allocation11], 1
    %1161 = vsyncpa [#allocation15], 1
    %1162 = vsyncpa [#allocation9], 1
    %s1163 = scalar_lea.sflag [#allocation9], 1
    %1164 = vsyncpa %s1163, 1
    %1165 = vsyncpa [#allocation19], 1

</llo_original>
